<compile_context>
chip_gen: v5e
topology: v5e:2x2
jax: 0.10.0
libtpu: 0.0.40
codegen_flags: <defaults>
</compile_context>

<pallas_src>
import jax
import jax.numpy as jnp
from jax import lax
from jax.experimental import pallas as pl
from jax.experimental.pallas import tpu as pltpu

NEG_SLOPE = 0.2


def _leaky_relu(h):
    return jnp.where(h > 0, h, NEG_SLOPE * h)


def dgan_kernel(x_ref, w1_ref, b1_ref, w2_ref, b2_ref, w3_ref, b3_ref, out_ref):
    """One batch tile per grid step, all three layers fused.

    Shapes inside the kernel (bt = batch_tile):
      x_ref  : (bt, n_in)     activations in their NATIVE layout (no wrapper transpose)
      w1_ref : (n_hid, n_in)  fc1.weight, native PyTorch (out, in) layout
      b1_ref : (n_hid, 1)
      w2_ref : (n_hid, n_hid) fc2.weight
      b2_ref : (n_hid, 1)
      w3_ref : (1, n_hid)     fc3.weight, native PyTorch layout
      b3_ref : (1, 1)
      out_ref: (1, bt)        lane-dense sigmoid output (batch on lanes)
    """
    w1 = w1_ref[...]                                   # bf16 (or f32)
    x = x_ref[...].astype(w1.dtype)                    # no-op if caller already feeds bf16

    # fc1: contract n_in (dim 1) of W1 with n_in (dim 1) of x -> (n_hid, bt).
    # The x "transpose" is folded into the MXU operand feed via dot_general.
    h = lax.dot_general(w1, x,
                        dimension_numbers=(((1,), (1,)), ((), ())),
                        preferred_element_type=jnp.float32)
    h = _leaky_relu(h + b1_ref[...])

    # fc2: (n_hid, n_hid) @ (n_hid, bt) -> (n_hid, bt), f32 accumulation on the MXU.
    w2 = w2_ref[...]
    h = jnp.dot(w2, h.astype(w2.dtype), preferred_element_type=jnp.float32)
    h = _leaky_relu(h + b2_ref[...])

    # fc3 as an M=1 MXU pass: (1, n_hid) @ (n_hid, bt) -> (1, bt), already lane-dense.
    w3 = w3_ref[...]
    logits = jnp.dot(w3, h.astype(w3.dtype), preferred_element_type=jnp.float32)
    logits = logits + b3_ref[...]

    # Exact sigmoid in f32 (approx reciprocal buys nothing on a 2-vreg epilogue).
    out_ref[...] = (1.0 / (1.0 + jnp.exp(-logits))).astype(out_ref.dtype)


def _tensorcores_per_chip():
    """Cores a single Pallas grid can shard across via 'parallel' (v7x / megacore = 2)."""
    try:
        kind = jax.devices()[0].device_kind.lower()
    except Exception:
        return 1
    return 2 if any(tag in kind for tag in ("v7", "7x", "v4", "v5p")) else 1


def _pick_batch_tile(B, n_cores):
    """Largest 128-multiple tile that divides B and leaves >= n_cores grid steps.

    One fat step per TensorCore: per-grid-step overhead (~0.35 us) dominates at small
    sizes, and the grid-invariant weights stay resident either way.
    """
    if B % 128 != 0 or B <= 128:
        return B                      # full-array block (masked lane stores, still correct)
    best = 128
    for bt in range(128, min(B, 1024) + 1, 128):
        if B % bt == 0 and B // bt >= n_cores:
            best = bt
    return best


def dgan_forward(x, params, *, batch_tile=None, transposed_output=False,
                 single_buffer_weights=None, vmem_limit_bytes=None):
    """x: (B, n_in); params as produced by init_params (weights in torch layout).

    transposed_output=False -> (B, 1) (PyTorch shape, costs one tiny relayout op).
    transposed_output=True  -> (B,)  lane-dense, no trailing relayout launch.
    """
    B, n_in = x.shape
    n_hid = params["w1"].shape[0]
    wdtype = params["w1"].dtype

    bt = batch_tile if batch_tile is not None else _pick_batch_tile(B, _tensorcores_per_chip())
    assert B % bt == 0, f"batch {B} must be divisible by batch_tile {bt}"
    assert bt == B or bt % 128 == 0, "batch_tile must be a multiple of 128 (or == B)"
    num_tiles = B // bt

    # --- production-size knobs (inert at tiny sizes) -------------------------------
    wbytes = (n_hid * n_in + n_hid * n_hid + n_hid) * jnp.dtype(wdtype).itemsize
    if single_buffer_weights is None:
        # Pallas double-buffers every input even when its index_map is constant;
        # single-buffer the grid-invariant weights once they stop being negligible
        # (halves their footprint on v7x's 64 MiB VMEM).
        single_buffer_weights = wbytes > (4 << 20)
    w_mode = {"pipeline_mode": pl.Buffered(1)} if single_buffer_weights else {}

    if vmem_limit_bytes is None:
        est = (2 * bt * (n_in + 1) * jnp.dtype(x.dtype).itemsize          # x + out tiles, 2-buffered
               + (1 if single_buffer_weights else 2) * wbytes             # weights/biases
               + 3 * bt * n_hid * 4)                                      # h1/h2 f32 intermediates
        if est > (24 << 20):
            vmem_limit_bytes = min(int(est * 3 // 2), 100 << 20)
    # --------------------------------------------------------------------------------

    rep = lambda i: (0, 0)                              # grid-invariant weights/biases

    out = pl.pallas_call(
        dgan_kernel,
        out_shape=jax.ShapeDtypeStruct((1, B), jnp.float32),
        grid_spec=pltpu.PrefetchScalarGridSpec(
            num_scalar_prefetch=0,
            grid=(num_tiles,),
            in_specs=[
                pl.BlockSpec((bt, n_in), lambda i: (i, 0)),          # x batch tile (native layout)
                pl.BlockSpec((n_hid, n_in), rep, **w_mode),          # W1
                pl.BlockSpec((n_hid, 1), rep, **w_mode),             # b1
                pl.BlockSpec((n_hid, n_hid), rep, **w_mode),         # W2
                pl.BlockSpec((n_hid, 1), rep, **w_mode),             # b2
                pl.BlockSpec((1, n_hid), rep, **w_mode),             # W3 row
                pl.BlockSpec((1, 1), rep, **w_mode),                 # b3
            ],
            out_specs=pl.BlockSpec((1, bt), lambda i: (0, i)),       # lane-dense output row
        ),
        compiler_params=pltpu.CompilerParams(
            dimension_semantics=("parallel",),          # shard batch tiles across TCs (v7x)
            vmem_limit_bytes=vmem_limit_bytes,
        ),
    )(x, params["w1"], params["b1"], params["w2"], params["b2"],
      params["w3"], params["b3"])

    if transposed_output:
        return out[0]                 # (B,), lane-dense, no relayout launch
    return out.reshape(B, 1)          # PyTorch-shaped (one tiny relayout op)


def init_params(key, n_in, n_hid, weight_dtype=jnp.bfloat16):
    """nn.Linear-style init.  Weights kept in native torch (out, in) layout, stored in
    `weight_dtype` (bf16 default -> half the weight DMA, bf16 MXU path).  Biases ride
    the f32 VPU path."""
    k1, k2, k3, k4, k5, k6 = jax.random.split(key, 6)

    def u(k, shape, fan_in, dtype):
        bound = 1.0 / jnp.sqrt(fan_in)
        return jax.random.uniform(k, shape, jnp.float32, -bound, bound).astype(dtype)

    return {
        "w1": u(k1, (n_hid, n_in), n_in, weight_dtype),   # fc1.weight
        "b1": u(k2, (n_hid, 1), n_in, jnp.float32),       # fc1.bias as column
        "w2": u(k3, (n_hid, n_hid), n_hid, weight_dtype), # fc2.weight
        "b2": u(k4, (n_hid, 1), n_hid, jnp.float32),      # fc2.bias as column
        "w3": u(k5, (1, n_hid), n_hid, weight_dtype),     # fc3.weight (native (1, n_hid))
        "b3": u(k6, (1, 1), n_hid, jnp.float32),          # fc3.bias
    }


def dgan_reference(x, p):
    """Pure-JAX f32 reference with PyTorch semantics."""
    w1 = p["w1"].astype(jnp.float32)
    w2 = p["w2"].astype(jnp.float32)
    w3 = p["w3"].astype(jnp.float32)
    b1 = p["b1"].astype(jnp.float32).reshape(1, -1)
    b2 = p["b2"].astype(jnp.float32).reshape(1, -1)
    b3 = p["b3"].astype(jnp.float32).reshape(1, -1)
    h = x @ w1.T + b1
    h = jnp.where(h > 0, h, NEG_SLOPE * h)
    h = h @ w2.T + b2
    h = jnp.where(h > 0, h, NEG_SLOPE * h)
    return jax.nn.sigmoid(h @ w3.T + b3)


if __name__ == "__main__":
    key = jax.random.PRNGKey(0)
    kx, kp = jax.random.split(key)

    # 128/256-multiples keep lanes dense and light up the 256x256 MXU on v6e/v7x;
    # total footprint is still well under 1 MiB.
    B, n_in, n_hid = 512, 128, 256
    x = jax.random.normal(kx, (B, n_in), jnp.float32)
    params = init_params(kp, n_in, n_hid, weight_dtype=jnp.bfloat16)

    # Perf-preferred path: lane-dense (B,) output, no trailing (1,B)->(B,1) relayout.
    out_t = jax.block_until_ready(dgan_forward(x, params, transposed_output=True))
    # PyTorch-shaped path.
    out = jax.block_until_ready(dgan_forward(x, params))

    ref = dgan_reference(x, params)
    assert out.shape == (B, 1)
    assert out_t.shape == (B,)
    # bf16 matmul operands vs the pure-f32 reference: loose tolerance.
    max_err = float(jnp.max(jnp.abs(out - ref)))
    assert jnp.allclose(out, ref, atol=2e-2), f"max abs err {max_err}"
    assert jnp.allclose(out_t, ref[:, 0], atol=2e-2), "transposed-output path mismatch"

    print("KERNEL_OK")
</pallas_src>

<mosaic_0001>
module attributes {stable_mosaic.version = 11 : i64} {
  func.func @dgan_kernel(%arg0: i32, %arg1: memref<512x128xf32, #tpu.memory_space<vmem>>, %arg2: memref<256x128xbf16, #tpu.memory_space<vmem>>, %arg3: memref<256x1xf32, #tpu.memory_space<vmem>>, %arg4: memref<256x256xbf16, #tpu.memory_space<vmem>>, %arg5: memref<256x1xf32, #tpu.memory_space<vmem>>, %arg6: memref<1x256xbf16, #tpu.memory_space<vmem>>, %arg7: memref<1x1xf32, #tpu.memory_space<vmem>>, %arg8: memref<1x512xf32, #tpu.memory_space<vmem>>) attributes {dimension_semantics = [#tpu.dimension_semantics<parallel>], iteration_bounds = array<i64: 1>, scalar_prefetch = 0 : i64, scratch_operands = 0 : i64, tpu.core_type = #tpu.core_type<tc>, window_params = [{transform_indices = @transform_0, window_bounds = array<i64: 512, 128>}, {pipeline_mode = #tpu.pipeline_mode<synchronous>, transform_indices = @transform_1, window_bounds = array<i64: 256, 128>}, {pipeline_mode = #tpu.pipeline_mode<synchronous>, transform_indices = @transform_2, window_bounds = array<i64: 256, 1>}, {pipeline_mode = #tpu.pipeline_mode<synchronous>, transform_indices = @transform_3, window_bounds = array<i64: 256, 256>}, {pipeline_mode = #tpu.pipeline_mode<synchronous>, transform_indices = @transform_4, window_bounds = array<i64: 256, 1>}, {pipeline_mode = #tpu.pipeline_mode<synchronous>, transform_indices = @transform_5, window_bounds = array<i64: 1, 256>}, {pipeline_mode = #tpu.pipeline_mode<synchronous>, transform_indices = @transform_6, window_bounds = array<i64: 1, 1>}, {transform_indices = @transform_7, window_bounds = array<i64: 1, 512>}]} {
    %c0 = arith.constant 0 : index
    %c0_0 = arith.constant 0 : index
    %0 = vector.load %arg2[%c0, %c0_0] : memref<256x128xbf16, #tpu.memory_space<vmem>>, vector<256x128xbf16>
    %c0_1 = arith.constant 0 : index
    %c0_2 = arith.constant 0 : index
    %1 = vector.load %arg1[%c0_1, %c0_2] : memref<512x128xf32, #tpu.memory_space<vmem>>, vector<512x128xf32>
    %2 = arith.truncf %1 : vector<512x128xf32> to vector<512x128xbf16>
    %cst = arith.constant dense<0.000000e+00> : vector<256x512xf32>
    %3 = tpu.matmul %0, %2, %cst {dimension_numbers = #tpu.dot_dimension_numbers<[1], [1], [0], [0], [0, 0, 1, 0], [], []>} : vector<256x128xbf16>, vector<512x128xbf16>, vector<256x512xf32> -> vector<256x512xf32>
    %c0_3 = arith.constant 0 : index
    %c0_4 = arith.constant 0 : index
    %4 = vector.load %arg3[%c0_3, %c0_4] : memref<256x1xf32, #tpu.memory_space<vmem>>, vector<256x1xf32>
    %5 = vector.broadcast %4 : vector<256x1xf32> to vector<256x512xf32>
    %6 = arith.addf %3, %5 : vector<256x512xf32>
    %cst_5 = arith.constant 0.000000e+00 : f32
    %7 = vector.broadcast %cst_5 : f32 to vector<256x512xf32>
    %8 = arith.cmpf ogt, %6, %7 : vector<256x512xf32>
    %cst_6 = arith.constant 2.000000e-01 : f32
    %9 = vector.broadcast %cst_6 : f32 to vector<256x512xf32>
    %10 = arith.mulf %9, %6 : vector<256x512xf32>
    %11 = arith.select %8, %6, %10 : vector<256x512xi1>, vector<256x512xf32>
    %c0_7 = arith.constant 0 : index
    %c0_8 = arith.constant 0 : index
    %12 = vector.load %arg4[%c0_7, %c0_8] : memref<256x256xbf16, #tpu.memory_space<vmem>>, vector<256x256xbf16>
    %13 = arith.truncf %11 : vector<256x512xf32> to vector<256x512xbf16>
    %cst_9 = arith.constant dense<0.000000e+00> : vector<256x512xf32>
    %14 = tpu.matmul %12, %13, %cst_9 {dimension_numbers = #tpu.dot_dimension_numbers<[1], [0], [0], [1], [0, 0, 1, 1], [], []>} : vector<256x256xbf16>, vector<256x512xbf16>, vector<256x512xf32> -> vector<256x512xf32>
    %c0_10 = arith.constant 0 : index
    %c0_11 = arith.constant 0 : index
    %15 = vector.load %arg5[%c0_10, %c0_11] : memref<256x1xf32, #tpu.memory_space<vmem>>, vector<256x1xf32>
    %16 = vector.broadcast %15 : vector<256x1xf32> to vector<256x512xf32>
    %17 = arith.addf %14, %16 : vector<256x512xf32>
    %cst_12 = arith.constant 0.000000e+00 : f32
    %18 = vector.broadcast %cst_12 : f32 to vector<256x512xf32>
    %19 = arith.cmpf ogt, %17, %18 : vector<256x512xf32>
    %cst_13 = arith.constant 2.000000e-01 : f32
    %20 = vector.broadcast %cst_13 : f32 to vector<256x512xf32>
    %21 = arith.mulf %20, %17 : vector<256x512xf32>
    %22 = arith.select %19, %17, %21 : vector<256x512xi1>, vector<256x512xf32>
    %c0_14 = arith.constant 0 : index
    %c0_15 = arith.constant 0 : index
    %23 = vector.load %arg6[%c0_14, %c0_15] : memref<1x256xbf16, #tpu.memory_space<vmem>>, vector<1x256xbf16>
    %24 = arith.truncf %22 : vector<256x512xf32> to vector<256x512xbf16>
    %cst_16 = arith.constant dense<0.000000e+00> : vector<1x512xf32>
    %25 = tpu.matmul %23, %24, %cst_16 {dimension_numbers = #tpu.dot_dimension_numbers<[1], [0], [0], [1], [0, 0, 1, 1], [], []>} : vector<1x256xbf16>, vector<256x512xbf16>, vector<1x512xf32> -> vector<1x512xf32>
    %c0_17 = arith.constant 0 : index
    %c0_18 = arith.constant 0 : index
    %26 = vector.load %arg7[%c0_17, %c0_18] : memref<1x1xf32, #tpu.memory_space<vmem>>, vector<1x1xf32>
    %27 = vector.broadcast %26 : vector<1x1xf32> to vector<1x512xf32>
    %28 = arith.addf %25, %27 : vector<1x512xf32>
    %cst_19 = arith.constant 0.000000e+00 : f32
    %29 = vector.broadcast %cst_19 : f32 to vector<1x512xf32>
    %30 = arith.subf %29, %28 : vector<1x512xf32>
    %31 = math.exp %30 : vector<1x512xf32>
    %cst_20 = arith.constant 1.000000e+00 : f32
    %32 = vector.broadcast %cst_20 : f32 to vector<1x512xf32>
    %33 = arith.addf %32, %31 : vector<1x512xf32>
    %cst_21 = arith.constant 1.000000e+00 : f32
    %34 = vector.broadcast %cst_21 : f32 to vector<1x512xf32>
    %35 = arith.divf %34, %33 : vector<1x512xf32>
    %c0_22 = arith.constant 0 : index
    %c0_23 = arith.constant 0 : index
    %36 = vector.load %arg8[%c0_22, %c0_23] : memref<1x512xf32, #tpu.memory_space<vmem>>, vector<1x512xf32>
    tpu.vector_store %arg8[%c0_22, %c0_23], %35 {strides = array<i32>} : memref<1x512xf32, #tpu.memory_space<vmem>>, vector<1x512xf32>,
    return
  }
  func.func @transform_0(%arg0: i32) -> (i32, i32) {
    %c0_i32 = arith.constant 0 : i32
    %c0_i32_0 = arith.constant 0 : i32
    return %arg0, %c0_i32 : i32, i32
  }
  func.func @transform_1(%arg0: i32) -> (i32, i32) {
    %c0_i32 = arith.constant 0 : i32
    %c0_i32_0 = arith.constant 0 : i32
    %c0_i32_1 = arith.constant 0 : i32
    return %c0_i32, %c0_i32_0 : i32, i32
  }
  func.func @transform_2(%arg0: i32) -> (i32, i32) {
    %c0_i32 = arith.constant 0 : i32
    %c0_i32_0 = arith.constant 0 : i32
    %c0_i32_1 = arith.constant 0 : i32
    return %c0_i32, %c0_i32_0 : i32, i32
  }
  func.func @transform_3(%arg0: i32) -> (i32, i32) {
    %c0_i32 = arith.constant 0 : i32
    %c0_i32_0 = arith.constant 0 : i32
    %c0_i32_1 = arith.constant 0 : i32
    return %c0_i32, %c0_i32_0 : i32, i32
  }
  func.func @transform_4(%arg0: i32) -> (i32, i32) {
    %c0_i32 = arith.constant 0 : i32
    %c0_i32_0 = arith.constant 0 : i32
    %c0_i32_1 = arith.constant 0 : i32
    return %c0_i32, %c0_i32_0 : i32, i32
  }
  func.func @transform_5(%arg0: i32) -> (i32, i32) {
    %c0_i32 = arith.constant 0 : i32
    %c0_i32_0 = arith.constant 0 : i32
    %c0_i32_1 = arith.constant 0 : i32
    return %c0_i32, %c0_i32_0 : i32, i32
  }
  func.func @transform_6(%arg0: i32) -> (i32, i32) {
    %c0_i32 = arith.constant 0 : i32
    %c0_i32_0 = arith.constant 0 : i32
    %c0_i32_1 = arith.constant 0 : i32
    return %c0_i32, %c0_i32_0 : i32, i32
  }
  func.func @transform_7(%arg0: i32) -> (i32, i32) {
    %c0_i32 = arith.constant 0 : i32
    %c0_i32_0 = arith.constant 0 : i32
    return %c0_i32, %arg0 : i32, i32
  }
}

</mosaic_0001>

<llo_original>
// kernel: tpu_custom_call.1
$region0: #{tpu_custom_call.1}
  #allocation0 [shape = 'u32[]', space=smem, size = 0x4, offset = 0x4, fixed_abs, tag = 'smem constant byte address 0x4 - core index']
  #allocation1 [shape = 'u32[72,128]{1,0:T(1,128)}', space=vmem, size = 0x9000, scoped, tag = 'internal scratch']
  #allocation2 [shape = 'f32[1,1]{1,0:T(1,128)S(1)}', space=vmem, size = 0x200, scoped, tag = 'scoped memory for tpu_custom_call.1']
  %s0 = inlined_call_operand.vmem [shape: f32[512,128], index: 0, kind: input, shape index: {}]
  %s1 = inlined_call_operand.hbm [shape: bf16[256,128], index: 1, kind: input, shape index: {}]
  %s2 = inlined_call_operand.vmem [shape: f32[256,1], index: 2, kind: input, shape index: {}]
  %s3 = inlined_call_operand.hbm [shape: bf16[256,256], index: 3, kind: input, shape index: {}]
  %s4 = inlined_call_operand.vmem [shape: f32[256,1], index: 4, kind: input, shape index: {}]
  %s5 = inlined_call_operand.vmem [shape: bf16[1,256], index: 5, kind: input, shape index: {}]
  %s6 = inlined_call_operand.<no memory space> [shape: f32[1,1], index: 6, kind: input, shape index: {}]
  %s7 = inlined_call_operand.hbm [shape: f32[1,512], index: 7, kind: output, shape index: {}]
  %s8 = sld [smem:[#allocation0]]
  $region46: #{tpu_custom_call.1} parent=0
    _
  %s10 = ssub.s32 1, %s8
  %s11 = scalar_select 0, %s10, %s8
  %v12 = vstv %s6
  %13 = vst [vmem:[#allocation2] sm:$0x1] %v12
  $region1: #{tpu_custom_call.1} parent=0
    #allocation3 [shape = 'u8[65536]{0}', space=vmem, size = 0x10000, scoped, tag = 'input window, operand 1, single buffered']
    #allocation4 [shape = 's32[1]{0}', space=sflag, size = 0x4, scoped, tag = 'scoped memory for tpu_custom_call.1']
    #allocation5 [shape = 's32[1]{0}', space=sflag, size = 0x4, scoped, tag = 'scoped memory for tpu_custom_call.1']
    #allocation6 [shape = 'u8[131072]{0}', space=vmem, size = 0x20000, scoped, tag = 'input window, operand 3, single buffered']
    #allocation7 [shape = 's32[1]{0}', space=sflag, size = 0x4, scoped, tag = 'scoped memory for tpu_custom_call.1']
    #allocation8 [shape = 'u8[2048]{0}', space=vmem, size = 0x800, scoped, tag = 'output window, operand 0, single buffered']
    %14 = vsyncpa [#allocation4], 0
    %15 = vsyncpa [#allocation7], 0
    %16 = vsyncpa [#allocation5], 0
    // Predicated region
    $region2: #{tpu_custom_call.1} parent=1 // pred_check
      _
    $region3: #{tpu_custom_call.1} parent=1 // pred_check_branch
      %18 = sbr.rel (0) target = $region5
    $region4: #{tpu_custom_call.1} parent=1 // pred_region
      _
    $region5: #{tpu_custom_call.1} parent=1 // pred_fallthru
      _
    // Predicated region
    $region6: #{tpu_custom_call.1} parent=1 // pred_check
      _
    $region7: #{tpu_custom_call.1} parent=1 // pred_check_branch
      %20 = sbr.rel (0) target = $region9
    $region8: #{tpu_custom_call.1} parent=1 // pred_region
      %22 = vsyncadd [#allocation4], 0
      %s23 = sshll.u32 %s1, 4
      %s24 = int_to_ptr.hbm [resolvable:$true] %s23
      %s25 = sshll.u32 [#allocation3], 4
      %s26 = int_to_ptr.vmem [resolvable:$true] %s25
      %31 = dma.hbm_to_vmem [thread:$0]  %s24, 2048, %s26, [#allocation4], 64, 64, 4
    $region9: #{tpu_custom_call.1} parent=1 // pred_fallthru
      _
    // Predicated region
    $region10: #{tpu_custom_call.1} parent=1 // pred_check
      _
    $region11: #{tpu_custom_call.1} parent=1 // pred_check_branch
      %33 = sbr.rel (0) target = $region13
    $region12: #{tpu_custom_call.1} parent=1 // pred_region
      _
    $region13: #{tpu_custom_call.1} parent=1 // pred_fallthru
      _
    // Predicated region
    $region14: #{tpu_custom_call.1} parent=1 // pred_check
      _
    $region15: #{tpu_custom_call.1} parent=1 // pred_check_branch
      %35 = sbr.rel (0) target = $region17
    $region16: #{tpu_custom_call.1} parent=1 // pred_region
      %37 = vsyncadd [#allocation7], 0
      %s38 = sshll.u32 %s3, 4
      %s39 = int_to_ptr.hbm [resolvable:$true] %s38
      %s40 = sshll.u32 [#allocation6], 4
      %s41 = int_to_ptr.vmem [resolvable:$true] %s40
      %46 = dma.hbm_to_vmem [thread:$0]  %s39, 4096, %s41, [#allocation7], 128, 128, 8
    $region17: #{tpu_custom_call.1} parent=1 // pred_fallthru
      _
    // Predicated region
    $region18: #{tpu_custom_call.1} parent=1 // pred_check
      _
    $region19: #{tpu_custom_call.1} parent=1 // pred_check_branch
      %48 = sbr.rel (0) target = $region21
    $region20: #{tpu_custom_call.1} parent=1 // pred_region
      _
    $region21: #{tpu_custom_call.1} parent=1 // pred_fallthru
      _
    // Predicated region
    $region22: #{tpu_custom_call.1} parent=1 // pred_check
      _
    $region23: #{tpu_custom_call.1} parent=1 // pred_check_branch
      %50 = sbr.rel (0) target = $region25
    $region24: #{tpu_custom_call.1} parent=1 // pred_region
      _
    $region25: #{tpu_custom_call.1} parent=1 // pred_fallthru
      _
    // Predicated region
    $region26: #{tpu_custom_call.1} parent=1 // pred_check
      _
    $region27: #{tpu_custom_call.1} parent=1 // pred_check_branch
      %52 = sbr.rel (0) target = $region29
    $region28: #{tpu_custom_call.1} parent=1 // pred_region
      _
    $region29: #{tpu_custom_call.1} parent=1 // pred_fallthru
      _
    // Predicated region
    $region30: #{tpu_custom_call.1} parent=1 // pred_check
      _
    $region31: #{tpu_custom_call.1} parent=1 // pred_check_branch
      %54 = sbr.rel (0) target = $region33
    $region32: #{tpu_custom_call.1} parent=1 // pred_region
      %56 = dma.done [#allocation4], 2048
    $region33: #{tpu_custom_call.1} parent=1 // pred_fallthru
      _
    // Predicated region
    $region34: #{tpu_custom_call.1} parent=1 // pred_check
      _
    $region35: #{tpu_custom_call.1} parent=1 // pred_check_branch
      %58 = sbr.rel (0) target = $region37
    $region36: #{tpu_custom_call.1} parent=1 // pred_region
      %60 = dma.done [#allocation7], 4096
    $region37: #{tpu_custom_call.1} parent=1 // pred_fallthru
      _
    %v61 = vld [vmem:[#allocation3] sm:$0xf]
    %v62 = vld [vmem:[#allocation3 + $0x4] sm:$0xf]
    %v63 = vld [vmem:[#allocation3 + $0x8] sm:$0xf]
    %v64 = vld [vmem:[#allocation3 + $0xc] sm:$0xf]
    %v65 = vld [vmem:[#allocation3 + $0x10] sm:$0xf]
    %v66 = vld [vmem:[#allocation3 + $0x14] sm:$0xf]
    %v67 = vld [vmem:[#allocation3 + $0x18] sm:$0xf]
    %v68 = vld [vmem:[#allocation3 + $0x1c] sm:$0xf]
    %v69 = vld [vmem:[#allocation3 + $0x20] sm:$0xf]
    %v70 = vld [vmem:[#allocation3 + $0x24] sm:$0xf]
    %v71 = vld [vmem:[#allocation3 + $0x28] sm:$0xf]
    %v72 = vld [vmem:[#allocation3 + $0x2c] sm:$0xf]
    %v73 = vld [vmem:[#allocation3 + $0x30] sm:$0xf]
    %v74 = vld [vmem:[#allocation3 + $0x34] sm:$0xf]
    %v75 = vld [vmem:[#allocation3 + $0x38] sm:$0xf]
    %v76 = vld [vmem:[#allocation3 + $0x3c] sm:$0xf]
    %v77 = vld [vmem:[#allocation3 + $0x40] sm:$0xf]
    %v78 = vld [vmem:[#allocation3 + $0x44] sm:$0xf]
    %v79 = vld [vmem:[#allocation3 + $0x48] sm:$0xf]
    %v80 = vld [vmem:[#allocation3 + $0x4c] sm:$0xf]
    %v81 = vld [vmem:[#allocation3 + $0x50] sm:$0xf]
    %v82 = vld [vmem:[#allocation3 + $0x54] sm:$0xf]
    %v83 = vld [vmem:[#allocation3 + $0x58] sm:$0xf]
    %v84 = vld [vmem:[#allocation3 + $0x5c] sm:$0xf]
    %v85 = vld [vmem:[#allocation3 + $0x60] sm:$0xf]
    %v86 = vld [vmem:[#allocation3 + $0x64] sm:$0xf]
    %v87 = vld [vmem:[#allocation3 + $0x68] sm:$0xf]
    %v88 = vld [vmem:[#allocation3 + $0x6c] sm:$0xf]
    %v89 = vld [vmem:[#allocation3 + $0x70] sm:$0xf]
    %v90 = vld [vmem:[#allocation3 + $0x74] sm:$0xf]
    %v91 = vld [vmem:[#allocation3 + $0x78] sm:$0xf]
    %v92 = vld [vmem:[#allocation3 + $0x7c] sm:$0xf]
    %v93 = vld [vmem:[%s0] sm:$0xff]
    %v94 = vld [vmem:[%s0 + $0x8] sm:$0xff]
    %v95 = vld [vmem:[%s0 + $0x10] sm:$0xff]
    %v96 = vld [vmem:[%s0 + $0x18] sm:$0xff]
    %v97 = vld [vmem:[%s0 + $0x20] sm:$0xff]
    %v98 = vld [vmem:[%s0 + $0x28] sm:$0xff]
    %v99 = vld [vmem:[%s0 + $0x30] sm:$0xff]
    %v100 = vld [vmem:[%s0 + $0x38] sm:$0xff]
    %v101 = vld [vmem:[%s0 + $0x40] sm:$0xff]
    %v102 = vld [vmem:[%s0 + $0x48] sm:$0xff]
    %v103 = vld [vmem:[%s0 + $0x50] sm:$0xff]
    %v104 = vld [vmem:[%s0 + $0x58] sm:$0xff]
    %v105 = vld [vmem:[%s0 + $0x60] sm:$0xff]
    %v106 = vld [vmem:[%s0 + $0x68] sm:$0xff]
    %v107 = vld [vmem:[%s0 + $0x70] sm:$0xff]
    %v108 = vld [vmem:[%s0 + $0x78] sm:$0xff]
    %v109 = vld [vmem:[%s0 + $0x80] sm:$0xff]
    %v110 = vld [vmem:[%s0 + $0x88] sm:$0xff]
    %v111 = vld [vmem:[%s0 + $0x90] sm:$0xff]
    %v112 = vld [vmem:[%s0 + $0x98] sm:$0xff]
    %v113 = vld [vmem:[%s0 + $0xa0] sm:$0xff]
    %v114 = vld [vmem:[%s0 + $0xa8] sm:$0xff]
    %v115 = vld [vmem:[%s0 + $0xb0] sm:$0xff]
    %v116 = vld [vmem:[%s0 + $0xb8] sm:$0xff]
    %v117 = vld [vmem:[%s0 + $0xc0] sm:$0xff]
    %v118 = vld [vmem:[%s0 + $0xc8] sm:$0xff]
    %v119 = vld [vmem:[%s0 + $0xd0] sm:$0xff]
    %v120 = vld [vmem:[%s0 + $0xd8] sm:$0xff]
    %v121 = vld [vmem:[%s0 + $0xe0] sm:$0xff]
    %v122 = vld [vmem:[%s0 + $0xe8] sm:$0xff]
    %v123 = vld [vmem:[%s0 + $0xf0] sm:$0xff]
    %v124 = vld [vmem:[%s0 + $0xf8] sm:$0xff]
    %v125 = vld [vmem:[%s0 + $0x100] sm:$0xff]
    %v126 = vld [vmem:[%s0 + $0x108] sm:$0xff]
    %v127 = vld [vmem:[%s0 + $0x110] sm:$0xff]
    %v128 = vld [vmem:[%s0 + $0x118] sm:$0xff]
    %v129 = vld [vmem:[%s0 + $0x120] sm:$0xff]
    %v130 = vld [vmem:[%s0 + $0x128] sm:$0xff]
    %v131 = vld [vmem:[%s0 + $0x130] sm:$0xff]
    %v132 = vld [vmem:[%s0 + $0x138] sm:$0xff]
    %v133 = vld [vmem:[%s0 + $0x140] sm:$0xff]
    %v134 = vld [vmem:[%s0 + $0x148] sm:$0xff]
    %v135 = vld [vmem:[%s0 + $0x150] sm:$0xff]
    %v136 = vld [vmem:[%s0 + $0x158] sm:$0xff]
    %v137 = vld [vmem:[%s0 + $0x160] sm:$0xff]
    %v138 = vld [vmem:[%s0 + $0x168] sm:$0xff]
    %v139 = vld [vmem:[%s0 + $0x170] sm:$0xff]
    %v140 = vld [vmem:[%s0 + $0x178] sm:$0xff]
    %v141 = vld [vmem:[%s0 + $0x180] sm:$0xff]
    %v142 = vld [vmem:[%s0 + $0x188] sm:$0xff]
    %v143 = vld [vmem:[%s0 + $0x190] sm:$0xff]
    %v144 = vld [vmem:[%s0 + $0x198] sm:$0xff]
    %v145 = vld [vmem:[%s0 + $0x1a0] sm:$0xff]
    %v146 = vld [vmem:[%s0 + $0x1a8] sm:$0xff]
    %v147 = vld [vmem:[%s0 + $0x1b0] sm:$0xff]
    %v148 = vld [vmem:[%s0 + $0x1b8] sm:$0xff]
    %v149 = vld [vmem:[%s0 + $0x1c0] sm:$0xff]
    %v150 = vld [vmem:[%s0 + $0x1c8] sm:$0xff]
    %v151 = vld [vmem:[%s0 + $0x1d0] sm:$0xff]
    %v152 = vld [vmem:[%s0 + $0x1d8] sm:$0xff]
    %v153 = vld [vmem:[%s0 + $0x1e0] sm:$0xff]
    %v154 = vld [vmem:[%s0 + $0x1e8] sm:$0xff]
    %v155 = vld [vmem:[%s0 + $0x1f0] sm:$0xff]
    %v156 = vld [vmem:[%s0 + $0x1f8] sm:$0xff]
    %v157 = vpack.c.bf16 %v94, %v93
    %v158 = vpack.c.bf16 %v96, %v95
    %v159 = vpack.c.bf16 %v98, %v97
    %v160 = vpack.c.bf16 %v100, %v99
    %v161 = vpack.c.bf16 %v102, %v101
    %v162 = vpack.c.bf16 %v104, %v103
    %v163 = vpack.c.bf16 %v106, %v105
    %v164 = vpack.c.bf16 %v108, %v107
    %v165 = vpack.c.bf16 %v110, %v109
    %v166 = vpack.c.bf16 %v112, %v111
    %v167 = vpack.c.bf16 %v114, %v113
    %v168 = vpack.c.bf16 %v116, %v115
    %v169 = vpack.c.bf16 %v118, %v117
    %v170 = vpack.c.bf16 %v120, %v119
    %v171 = vpack.c.bf16 %v122, %v121
    %v172 = vpack.c.bf16 %v124, %v123
    %v173 = vpack.c.bf16 %v126, %v125
    %v174 = vpack.c.bf16 %v128, %v127
    %v175 = vpack.c.bf16 %v130, %v129
    %v176 = vpack.c.bf16 %v132, %v131
    %v177 = vpack.c.bf16 %v134, %v133
    %v178 = vpack.c.bf16 %v136, %v135
    %v179 = vpack.c.bf16 %v138, %v137
    %v180 = vpack.c.bf16 %v140, %v139
    %v181 = vpack.c.bf16 %v142, %v141
    %v182 = vpack.c.bf16 %v144, %v143
    %v183 = vpack.c.bf16 %v146, %v145
    %v184 = vpack.c.bf16 %v148, %v147
    %v185 = vpack.c.bf16 %v150, %v149
    %v186 = vpack.c.bf16 %v152, %v151
    %v187 = vpack.c.bf16 %v154, %v153
    %v188 = vpack.c.bf16 %v156, %v155
    %v189 = vld [vmem:[%s2] sm:$0xff]
    %v190 = vld [vmem:[%s2 + $0x8] sm:$0xff]
    %v191 = vld [vmem:[%s2 + $0x10] sm:$0xff]
    %v192 = vld [vmem:[%s2 + $0x18] sm:$0xff]
    %v193 = vld [vmem:[%s2 + $0x20] sm:$0xff]
    %v194 = vld [vmem:[%s2 + $0x28] sm:$0xff]
    %v195 = vld [vmem:[%s2 + $0x30] sm:$0xff]
    %v196 = vld [vmem:[%s2 + $0x38] sm:$0xff]
    %v197 = vld [vmem:[%s2 + $0x40] sm:$0xff]
    %v198 = vld [vmem:[%s2 + $0x48] sm:$0xff]
    %v199 = vld [vmem:[%s2 + $0x50] sm:$0xff]
    %v200 = vld [vmem:[%s2 + $0x58] sm:$0xff]
    %v201 = vld [vmem:[%s2 + $0x60] sm:$0xff]
    %v202 = vld [vmem:[%s2 + $0x68] sm:$0xff]
    %v203 = vld [vmem:[%s2 + $0x70] sm:$0xff]
    %v204 = vld [vmem:[%s2 + $0x78] sm:$0xff]
    %v205 = vld [vmem:[%s2 + $0x80] sm:$0xff]
    %v206 = vld [vmem:[%s2 + $0x88] sm:$0xff]
    %v207 = vld [vmem:[%s2 + $0x90] sm:$0xff]
    %v208 = vld [vmem:[%s2 + $0x98] sm:$0xff]
    %v209 = vld [vmem:[%s2 + $0xa0] sm:$0xff]
    %v210 = vld [vmem:[%s2 + $0xa8] sm:$0xff]
    %v211 = vld [vmem:[%s2 + $0xb0] sm:$0xff]
    %v212 = vld [vmem:[%s2 + $0xb8] sm:$0xff]
    %v213 = vld [vmem:[%s2 + $0xc0] sm:$0xff]
    %v214 = vld [vmem:[%s2 + $0xc8] sm:$0xff]
    %v215 = vld [vmem:[%s2 + $0xd0] sm:$0xff]
    %v216 = vld [vmem:[%s2 + $0xd8] sm:$0xff]
    %v217 = vld [vmem:[%s2 + $0xe0] sm:$0xff]
    %v218 = vld [vmem:[%s2 + $0xe8] sm:$0xff]
    %v219 = vld [vmem:[%s2 + $0xf0] sm:$0xff]
    %v220 = vld [vmem:[%s2 + $0xf8] sm:$0xff]
    %222 = vset.pattern.permute.xlu0 0
    %223 = vperm.xlu0 %222, %v189
    %v224 = vpop.permute.xlu0 %223
    %227 = vset.pattern.permute.xlu0 0
    %228 = vperm.xlu0 %227, %v190
    %v229 = vpop.permute.xlu0 %228
    %232 = vset.pattern.permute.xlu0 0
    %233 = vperm.xlu0 %232, %v191
    %v234 = vpop.permute.xlu0 %233
    %237 = vset.pattern.permute.xlu0 0
    %238 = vperm.xlu0 %237, %v192
    %v239 = vpop.permute.xlu0 %238
    %242 = vset.pattern.permute.xlu0 0
    %243 = vperm.xlu0 %242, %v193
    %v244 = vpop.permute.xlu0 %243
    %247 = vset.pattern.permute.xlu0 0
    %248 = vperm.xlu0 %247, %v194
    %v249 = vpop.permute.xlu0 %248
    %252 = vset.pattern.permute.xlu0 0
    %253 = vperm.xlu0 %252, %v195
    %v254 = vpop.permute.xlu0 %253
    %257 = vset.pattern.permute.xlu0 0
    %258 = vperm.xlu0 %257, %v196
    %v259 = vpop.permute.xlu0 %258
    %262 = vset.pattern.permute.xlu0 0
    %263 = vperm.xlu0 %262, %v197
    %v264 = vpop.permute.xlu0 %263
    %267 = vset.pattern.permute.xlu0 0
    %268 = vperm.xlu0 %267, %v198
    %v269 = vpop.permute.xlu0 %268
    %272 = vset.pattern.permute.xlu0 0
    %273 = vperm.xlu0 %272, %v199
    %v274 = vpop.permute.xlu0 %273
    %277 = vset.pattern.permute.xlu0 0
    %278 = vperm.xlu0 %277, %v200
    %v279 = vpop.permute.xlu0 %278
    %282 = vset.pattern.permute.xlu0 0
    %283 = vperm.xlu0 %282, %v201
    %v284 = vpop.permute.xlu0 %283
    %287 = vset.pattern.permute.xlu0 0
    %288 = vperm.xlu0 %287, %v202
    %v289 = vpop.permute.xlu0 %288
    %292 = vset.pattern.permute.xlu0 0
    %293 = vperm.xlu0 %292, %v203
    %v294 = vpop.permute.xlu0 %293
    %297 = vset.pattern.permute.xlu0 0
    %298 = vperm.xlu0 %297, %v204
    %v299 = vpop.permute.xlu0 %298
    %302 = vset.pattern.permute.xlu0 0
    %303 = vperm.xlu0 %302, %v205
    %v304 = vpop.permute.xlu0 %303
    %307 = vset.pattern.permute.xlu0 0
    %308 = vperm.xlu0 %307, %v206
    %v309 = vpop.permute.xlu0 %308
    %312 = vset.pattern.permute.xlu0 0
    %313 = vperm.xlu0 %312, %v207
    %v314 = vpop.permute.xlu0 %313
    %317 = vset.pattern.permute.xlu0 0
    %318 = vperm.xlu0 %317, %v208
    %v319 = vpop.permute.xlu0 %318
    %322 = vset.pattern.permute.xlu0 0
    %323 = vperm.xlu0 %322, %v209
    %v324 = vpop.permute.xlu0 %323
    %327 = vset.pattern.permute.xlu0 0
    %328 = vperm.xlu0 %327, %v210
    %v329 = vpop.permute.xlu0 %328
    %332 = vset.pattern.permute.xlu0 0
    %333 = vperm.xlu0 %332, %v211
    %v334 = vpop.permute.xlu0 %333
    %337 = vset.pattern.permute.xlu0 0
    %338 = vperm.xlu0 %337, %v212
    %v339 = vpop.permute.xlu0 %338
    %342 = vset.pattern.permute.xlu0 0
    %343 = vperm.xlu0 %342, %v213
    %v344 = vpop.permute.xlu0 %343
    %347 = vset.pattern.permute.xlu0 0
    %348 = vperm.xlu0 %347, %v214
    %v349 = vpop.permute.xlu0 %348
    %352 = vset.pattern.permute.xlu0 0
    %353 = vperm.xlu0 %352, %v215
    %v354 = vpop.permute.xlu0 %353
    %357 = vset.pattern.permute.xlu0 0
    %358 = vperm.xlu0 %357, %v216
    %v359 = vpop.permute.xlu0 %358
    %362 = vset.pattern.permute.xlu0 0
    %363 = vperm.xlu0 %362, %v217
    %v364 = vpop.permute.xlu0 %363
    %367 = vset.pattern.permute.xlu0 0
    %368 = vperm.xlu0 %367, %v218
    %v369 = vpop.permute.xlu0 %368
    %372 = vset.pattern.permute.xlu0 0
    %373 = vperm.xlu0 %372, %v219
    %v374 = vpop.permute.xlu0 %373
    %377 = vset.pattern.permute.xlu0 0
    %378 = vperm.xlu0 %377, %v220
    %v379 = vpop.permute.xlu0 %378
    %v413 = vunpack.c.l.b16 %v61
    %v414 = vunpack.c.l.b16 %v62
    %v415 = vunpack.c.l.b16 %v63
    %v416 = vunpack.c.l.b16 %v64
    %v417 = vunpack.c.l.b16 %v65
    %v418 = vunpack.c.l.b16 %v66
    %v419 = vunpack.c.l.b16 %v67
    %v420 = vunpack.c.l.b16 %v68
    %v421 = vunpack.c.l.b16 %v69
    %v422 = vunpack.c.l.b16 %v70
    %v423 = vunpack.c.l.b16 %v71
    %v424 = vunpack.c.l.b16 %v72
    %v425 = vunpack.c.l.b16 %v73
    %v426 = vunpack.c.l.b16 %v74
    %v427 = vunpack.c.l.b16 %v75
    %v428 = vunpack.c.l.b16 %v76
    %v429 = vunpack.c.l.b16 %v77
    %v430 = vunpack.c.l.b16 %v78
    %v431 = vunpack.c.l.b16 %v79
    %v432 = vunpack.c.l.b16 %v80
    %v433 = vunpack.c.l.b16 %v81
    %v434 = vunpack.c.l.b16 %v82
    %v435 = vunpack.c.l.b16 %v83
    %v436 = vunpack.c.l.b16 %v84
    %v437 = vunpack.c.l.b16 %v85
    %v438 = vunpack.c.l.b16 %v86
    %v439 = vunpack.c.l.b16 %v87
    %v440 = vunpack.c.l.b16 %v88
    %v441 = vunpack.c.l.b16 %v89
    %v442 = vunpack.c.l.b16 %v90
    %v443 = vunpack.c.l.b16 %v91
    %v444 = vunpack.c.l.b16 %v92
    %v445 = vpack.c.b16 %v414, %v413
    %v446 = vpack.c.b16 %v416, %v415
    %v447 = vpack.c.b16 %v418, %v417
    %v448 = vpack.c.b16 %v420, %v419
    %v449 = vpack.c.b16 %v422, %v421
    %v450 = vpack.c.b16 %v424, %v423
    %v451 = vpack.c.b16 %v426, %v425
    %v452 = vpack.c.b16 %v428, %v427
    %v453 = vpack.c.b16 %v430, %v429
    %v454 = vpack.c.b16 %v432, %v431
    %v455 = vpack.c.b16 %v434, %v433
    %v456 = vpack.c.b16 %v436, %v435
    %v457 = vpack.c.b16 %v438, %v437
    %v458 = vpack.c.b16 %v440, %v439
    %v459 = vpack.c.b16 %v442, %v441
    %v460 = vpack.c.b16 %v444, %v443
    %477 = vmatpush.bf16.xpose.msra.mxu0 %v164
    %478 = vmatpush.bf16.xpose.msra.mxu0 %v163
    %479 = vmatpush.bf16.xpose.msra.mxu0 %v162
    %480 = vmatpush.bf16.xpose.msra.mxu0 %v161
    %481 = vmatpush.bf16.xpose.msra.mxu0 %v160
    %482 = vmatpush.bf16.xpose.msra.mxu0 %v159
    %483 = vmatpush.bf16.xpose.msra.mxu0 %v158
    %484 = vmatpush.bf16.xpose.msra.mxu0 %v157
    %485 = vmatmul.bf16.gmra.mxu0 %v445
    %v486 = vpop.f32.mrf.mxu0
    %v487 = vadd.f32 %v224, %v486
    %v488 = vpop.f32.mrf.mxu0
    %v489 = vadd.f32 %v229, %v488
    %490 = vmatmul.bf16.gmra.mxu0 %v446
    %v491 = vpop.f32.mrf.mxu0
    %v492 = vadd.f32 %v234, %v491
    %v493 = vpop.f32.mrf.mxu0
    %v494 = vadd.f32 %v239, %v493
    %495 = vmatmul.bf16.gmra.mxu0 %v447
    %v496 = vpop.f32.mrf.mxu0
    %v497 = vadd.f32 %v244, %v496
    %v498 = vpop.f32.mrf.mxu0
    %v499 = vadd.f32 %v249, %v498
    %500 = vmatmul.bf16.gmra.mxu0 %v448
    %v501 = vpop.f32.mrf.mxu0
    %v502 = vadd.f32 %v254, %v501
    %v503 = vpop.f32.mrf.mxu0
    %v504 = vadd.f32 %v259, %v503
    %505 = vmatmul.bf16.gmra.mxu0 %v449
    %v506 = vpop.f32.mrf.mxu0
    %v507 = vadd.f32 %v264, %v506
    %v508 = vpop.f32.mrf.mxu0
    %v509 = vadd.f32 %v269, %v508
    %510 = vmatmul.bf16.gmra.mxu0 %v450
    %v511 = vpop.f32.mrf.mxu0
    %v512 = vadd.f32 %v274, %v511
    %v513 = vpop.f32.mrf.mxu0
    %v514 = vadd.f32 %v279, %v513
    %515 = vmatmul.bf16.gmra.mxu0 %v451
    %v516 = vpop.f32.mrf.mxu0
    %v517 = vadd.f32 %v284, %v516
    %v518 = vpop.f32.mrf.mxu0
    %v519 = vadd.f32 %v289, %v518
    %520 = vmatmul.bf16.gmra.mxu0 %v452
    %v521 = vpop.f32.mrf.mxu0
    %v522 = vadd.f32 %v294, %v521
    %v523 = vpop.f32.mrf.mxu0
    %v524 = vadd.f32 %v299, %v523
    %525 = vmatmul.bf16.gmra.mxu0 %v453
    %v526 = vpop.f32.mrf.mxu0
    %v527 = vadd.f32 %v304, %v526
    %v528 = vpop.f32.mrf.mxu0
    %v529 = vadd.f32 %v309, %v528
    %530 = vmatmul.bf16.gmra.mxu0 %v454
    %v531 = vpop.f32.mrf.mxu0
    %v532 = vadd.f32 %v314, %v531
    %v533 = vpop.f32.mrf.mxu0
    %v534 = vadd.f32 %v319, %v533
    %535 = vmatmul.bf16.gmra.mxu0 %v455
    %v536 = vpop.f32.mrf.mxu0
    %v537 = vadd.f32 %v324, %v536
    %v538 = vpop.f32.mrf.mxu0
    %v539 = vadd.f32 %v329, %v538
    %540 = vmatmul.bf16.gmra.mxu0 %v456
    %v541 = vpop.f32.mrf.mxu0
    %v542 = vadd.f32 %v334, %v541
    %v543 = vpop.f32.mrf.mxu0
    %v544 = vadd.f32 %v339, %v543
    %545 = vmatmul.bf16.gmra.mxu0 %v457
    %v546 = vpop.f32.mrf.mxu0
    %v547 = vadd.f32 %v344, %v546
    %v548 = vpop.f32.mrf.mxu0
    %v549 = vadd.f32 %v349, %v548
    %550 = vmatmul.bf16.gmra.mxu0 %v458
    %v551 = vpop.f32.mrf.mxu0
    %v552 = vadd.f32 %v354, %v551
    %v553 = vpop.f32.mrf.mxu0
    %v554 = vadd.f32 %v359, %v553
    %555 = vmatmul.bf16.gmra.mxu0 %v459
    %v556 = vpop.f32.mrf.mxu0
    %v557 = vadd.f32 %v364, %v556
    %v558 = vpop.f32.mrf.mxu0
    %v559 = vadd.f32 %v369, %v558
    %560 = vmatmul.bf16.gmra.mxu0 %v460
    %v561 = vpop.f32.mrf.mxu0
    %v562 = vadd.f32 %v374, %v561
    %v563 = vpop.f32.mrf.mxu0
    %v564 = vadd.f32 %v379, %v563
    %565 = vdwg.mxu0
    %566 = vmatpush.bf16.xpose.msra.mxu0 %v172
    %567 = vmatpush.bf16.xpose.msra.mxu0 %v171
    %568 = vmatpush.bf16.xpose.msra.mxu0 %v170
    %569 = vmatpush.bf16.xpose.msra.mxu0 %v169
    %570 = vmatpush.bf16.xpose.msra.mxu0 %v168
    %571 = vmatpush.bf16.xpose.msra.mxu0 %v167
    %572 = vmatpush.bf16.xpose.msra.mxu0 %v166
    %573 = vmatpush.bf16.xpose.msra.mxu0 %v165
    %574 = vmatmul.bf16.gmra.mxu0 %v445
    %v575 = vpop.f32.mrf.mxu0
    %v576 = vadd.f32 %v224, %v575
    %v577 = vpop.f32.mrf.mxu0
    %v578 = vadd.f32 %v229, %v577
    %579 = vmatmul.bf16.gmra.mxu0 %v446
    %v580 = vpop.f32.mrf.mxu0
    %v581 = vadd.f32 %v234, %v580
    %v582 = vpop.f32.mrf.mxu0
    %v583 = vadd.f32 %v239, %v582
    %584 = vmatmul.bf16.gmra.mxu0 %v447
    %v585 = vpop.f32.mrf.mxu0
    %v586 = vadd.f32 %v244, %v585
    %v587 = vpop.f32.mrf.mxu0
    %v588 = vadd.f32 %v249, %v587
    %589 = vmatmul.bf16.gmra.mxu0 %v448
    %v590 = vpop.f32.mrf.mxu0
    %v591 = vadd.f32 %v254, %v590
    %v592 = vpop.f32.mrf.mxu0
    %v593 = vadd.f32 %v259, %v592
    %594 = vmatmul.bf16.gmra.mxu0 %v449
    %v595 = vpop.f32.mrf.mxu0
    %v596 = vadd.f32 %v264, %v595
    %v597 = vpop.f32.mrf.mxu0
    %v598 = vadd.f32 %v269, %v597
    %599 = vmatmul.bf16.gmra.mxu0 %v450
    %v600 = vpop.f32.mrf.mxu0
    %v601 = vadd.f32 %v274, %v600
    %v602 = vpop.f32.mrf.mxu0
    %v603 = vadd.f32 %v279, %v602
    %604 = vmatmul.bf16.gmra.mxu0 %v451
    %v605 = vpop.f32.mrf.mxu0
    %v606 = vadd.f32 %v284, %v605
    %v607 = vpop.f32.mrf.mxu0
    %v608 = vadd.f32 %v289, %v607
    %609 = vmatmul.bf16.gmra.mxu0 %v452
    %v610 = vpop.f32.mrf.mxu0
    %v611 = vadd.f32 %v294, %v610
    %v612 = vpop.f32.mrf.mxu0
    %v613 = vadd.f32 %v299, %v612
    %614 = vmatmul.bf16.gmra.mxu0 %v453
    %v615 = vpop.f32.mrf.mxu0
    %v616 = vadd.f32 %v304, %v615
    %v617 = vpop.f32.mrf.mxu0
    %v618 = vadd.f32 %v309, %v617
    %619 = vmatmul.bf16.gmra.mxu0 %v454
    %v620 = vpop.f32.mrf.mxu0
    %v621 = vadd.f32 %v314, %v620
    %v622 = vpop.f32.mrf.mxu0
    %v623 = vadd.f32 %v319, %v622
    %624 = vmatmul.bf16.gmra.mxu0 %v455
    %v625 = vpop.f32.mrf.mxu0
    %v626 = vadd.f32 %v324, %v625
    %v627 = vpop.f32.mrf.mxu0
    %v628 = vadd.f32 %v329, %v627
    %629 = vmatmul.bf16.gmra.mxu0 %v456
    %v630 = vpop.f32.mrf.mxu0
    %v631 = vadd.f32 %v334, %v630
    %v632 = vpop.f32.mrf.mxu0
    %v633 = vadd.f32 %v339, %v632
    %634 = vmatmul.bf16.gmra.mxu0 %v457
    %v635 = vpop.f32.mrf.mxu0
    %v636 = vadd.f32 %v344, %v635
    %v637 = vpop.f32.mrf.mxu0
    %v638 = vadd.f32 %v349, %v637
    %639 = vmatmul.bf16.gmra.mxu0 %v458
    %v640 = vpop.f32.mrf.mxu0
    %v641 = vadd.f32 %v354, %v640
    %v642 = vpop.f32.mrf.mxu0
    %v643 = vadd.f32 %v359, %v642
    %644 = vmatmul.bf16.gmra.mxu0 %v459
    %v645 = vpop.f32.mrf.mxu0
    %v646 = vadd.f32 %v364, %v645
    %v647 = vpop.f32.mrf.mxu0
    %v648 = vadd.f32 %v369, %v647
    %649 = vmatmul.bf16.gmra.mxu0 %v460
    %v650 = vpop.f32.mrf.mxu0
    %v651 = vadd.f32 %v374, %v650
    %v652 = vpop.f32.mrf.mxu0
    %v653 = vadd.f32 %v379, %v652
    %654 = vdwg.mxu0
    %655 = vmatpush.bf16.xpose.msra.mxu0 %v180
    %656 = vmatpush.bf16.xpose.msra.mxu0 %v179
    %657 = vmatpush.bf16.xpose.msra.mxu0 %v178
    %658 = vmatpush.bf16.xpose.msra.mxu0 %v177
    %659 = vmatpush.bf16.xpose.msra.mxu0 %v176
    %660 = vmatpush.bf16.xpose.msra.mxu0 %v175
    %661 = vmatpush.bf16.xpose.msra.mxu0 %v174
    %662 = vmatpush.bf16.xpose.msra.mxu0 %v173
    %663 = vmatmul.bf16.gmra.mxu0 %v445
    %v664 = vpop.f32.mrf.mxu0
    %v665 = vadd.f32 %v224, %v664
    %v666 = vpop.f32.mrf.mxu0
    %v667 = vadd.f32 %v229, %v666
    %668 = vmatmul.bf16.gmra.mxu0 %v446
    %v669 = vpop.f32.mrf.mxu0
    %v670 = vadd.f32 %v234, %v669
    %v671 = vpop.f32.mrf.mxu0
    %v672 = vadd.f32 %v239, %v671
    %673 = vmatmul.bf16.gmra.mxu0 %v447
    %v674 = vpop.f32.mrf.mxu0
    %v675 = vadd.f32 %v244, %v674
    %v676 = vpop.f32.mrf.mxu0
    %v677 = vadd.f32 %v249, %v676
    %678 = vmatmul.bf16.gmra.mxu0 %v448
    %v679 = vpop.f32.mrf.mxu0
    %v680 = vadd.f32 %v254, %v679
    %v681 = vpop.f32.mrf.mxu0
    %v682 = vadd.f32 %v259, %v681
    %683 = vmatmul.bf16.gmra.mxu0 %v449
    %v684 = vpop.f32.mrf.mxu0
    %v685 = vadd.f32 %v264, %v684
    %v686 = vpop.f32.mrf.mxu0
    %v687 = vadd.f32 %v269, %v686
    %688 = vmatmul.bf16.gmra.mxu0 %v450
    %v689 = vpop.f32.mrf.mxu0
    %v690 = vadd.f32 %v274, %v689
    %v691 = vpop.f32.mrf.mxu0
    %v692 = vadd.f32 %v279, %v691
    %693 = vmatmul.bf16.gmra.mxu0 %v451
    %v694 = vpop.f32.mrf.mxu0
    %v695 = vadd.f32 %v284, %v694
    %v696 = vpop.f32.mrf.mxu0
    %v697 = vadd.f32 %v289, %v696
    %698 = vmatmul.bf16.gmra.mxu0 %v452
    %v699 = vpop.f32.mrf.mxu0
    %v700 = vadd.f32 %v294, %v699
    %v701 = vpop.f32.mrf.mxu0
    %v702 = vadd.f32 %v299, %v701
    %703 = vmatmul.bf16.gmra.mxu0 %v453
    %v704 = vpop.f32.mrf.mxu0
    %v705 = vadd.f32 %v304, %v704
    %v706 = vpop.f32.mrf.mxu0
    %v707 = vadd.f32 %v309, %v706
    %708 = vmatmul.bf16.gmra.mxu0 %v454
    %v709 = vpop.f32.mrf.mxu0
    %v710 = vadd.f32 %v314, %v709
    %v711 = vpop.f32.mrf.mxu0
    %v712 = vadd.f32 %v319, %v711
    %713 = vmatmul.bf16.gmra.mxu0 %v455
    %v714 = vpop.f32.mrf.mxu0
    %v715 = vadd.f32 %v324, %v714
    %v716 = vpop.f32.mrf.mxu0
    %v717 = vadd.f32 %v329, %v716
    %718 = vmatmul.bf16.gmra.mxu0 %v456
    %v719 = vpop.f32.mrf.mxu0
    %v720 = vadd.f32 %v334, %v719
    %v721 = vpop.f32.mrf.mxu0
    %v722 = vadd.f32 %v339, %v721
    %723 = vmatmul.bf16.gmra.mxu0 %v457
    %v724 = vpop.f32.mrf.mxu0
    %v725 = vadd.f32 %v344, %v724
    %v726 = vpop.f32.mrf.mxu0
    %v727 = vadd.f32 %v349, %v726
    %728 = vmatmul.bf16.gmra.mxu0 %v458
    %v729 = vpop.f32.mrf.mxu0
    %v730 = vadd.f32 %v354, %v729
    %v731 = vpop.f32.mrf.mxu0
    %v732 = vadd.f32 %v359, %v731
    %733 = vmatmul.bf16.gmra.mxu0 %v459
    %v734 = vpop.f32.mrf.mxu0
    %v735 = vadd.f32 %v364, %v734
    %v736 = vpop.f32.mrf.mxu0
    %v737 = vadd.f32 %v369, %v736
    %738 = vmatmul.bf16.gmra.mxu0 %v460
    %v739 = vpop.f32.mrf.mxu0
    %v740 = vadd.f32 %v374, %v739
    %v741 = vpop.f32.mrf.mxu0
    %v742 = vadd.f32 %v379, %v741
    %743 = vdwg.mxu0
    %744 = vmatpush.bf16.xpose.msra.mxu0 %v188
    %745 = vmatpush.bf16.xpose.msra.mxu0 %v187
    %746 = vmatpush.bf16.xpose.msra.mxu0 %v186
    %747 = vmatpush.bf16.xpose.msra.mxu0 %v185
    %748 = vmatpush.bf16.xpose.msra.mxu0 %v184
    %749 = vmatpush.bf16.xpose.msra.mxu0 %v183
    %750 = vmatpush.bf16.xpose.msra.mxu0 %v182
    %751 = vmatpush.bf16.xpose.msra.mxu0 %v181
    %752 = vmatmul.bf16.gmra.mxu0 %v445
    %v753 = vpop.f32.mrf.mxu0
    %v754 = vadd.f32 %v224, %v753
    %v755 = vpop.f32.mrf.mxu0
    %v756 = vadd.f32 %v229, %v755
    %757 = vmatmul.bf16.gmra.mxu0 %v446
    %v758 = vpop.f32.mrf.mxu0
    %v759 = vadd.f32 %v234, %v758
    %v760 = vpop.f32.mrf.mxu0
    %v761 = vadd.f32 %v239, %v760
    %762 = vmatmul.bf16.gmra.mxu0 %v447
    %v763 = vpop.f32.mrf.mxu0
    %v764 = vadd.f32 %v244, %v763
    %v765 = vpop.f32.mrf.mxu0
    %v766 = vadd.f32 %v249, %v765
    %767 = vmatmul.bf16.gmra.mxu0 %v448
    %v768 = vpop.f32.mrf.mxu0
    %v769 = vadd.f32 %v254, %v768
    %v770 = vpop.f32.mrf.mxu0
    %v771 = vadd.f32 %v259, %v770
    %772 = vmatmul.bf16.gmra.mxu0 %v449
    %v773 = vpop.f32.mrf.mxu0
    %v774 = vadd.f32 %v264, %v773
    %v775 = vpop.f32.mrf.mxu0
    %v776 = vadd.f32 %v269, %v775
    %777 = vmatmul.bf16.gmra.mxu0 %v450
    %v778 = vpop.f32.mrf.mxu0
    %v779 = vadd.f32 %v274, %v778
    %v780 = vpop.f32.mrf.mxu0
    %v781 = vadd.f32 %v279, %v780
    %782 = vmatmul.bf16.gmra.mxu0 %v451
    %v783 = vpop.f32.mrf.mxu0
    %v784 = vadd.f32 %v284, %v783
    %v785 = vpop.f32.mrf.mxu0
    %v786 = vadd.f32 %v289, %v785
    %787 = vmatmul.bf16.gmra.mxu0 %v452
    %v788 = vpop.f32.mrf.mxu0
    %v789 = vadd.f32 %v294, %v788
    %v790 = vpop.f32.mrf.mxu0
    %v791 = vadd.f32 %v299, %v790
    %792 = vmatmul.bf16.gmra.mxu0 %v453
    %v793 = vpop.f32.mrf.mxu0
    %v794 = vadd.f32 %v304, %v793
    %v795 = vpop.f32.mrf.mxu0
    %v796 = vadd.f32 %v309, %v795
    %797 = vmatmul.bf16.gmra.mxu0 %v454
    %v798 = vpop.f32.mrf.mxu0
    %v799 = vadd.f32 %v314, %v798
    %v800 = vpop.f32.mrf.mxu0
    %v801 = vadd.f32 %v319, %v800
    %802 = vmatmul.bf16.gmra.mxu0 %v455
    %v803 = vpop.f32.mrf.mxu0
    %v804 = vadd.f32 %v324, %v803
    %v805 = vpop.f32.mrf.mxu0
    %v806 = vadd.f32 %v329, %v805
    %807 = vmatmul.bf16.gmra.mxu0 %v456
    %v808 = vpop.f32.mrf.mxu0
    %v809 = vadd.f32 %v334, %v808
    %v810 = vpop.f32.mrf.mxu0
    %v811 = vadd.f32 %v339, %v810
    %812 = vmatmul.bf16.gmra.mxu0 %v457
    %v813 = vpop.f32.mrf.mxu0
    %v814 = vadd.f32 %v344, %v813
    %v815 = vpop.f32.mrf.mxu0
    %v816 = vadd.f32 %v349, %v815
    %817 = vmatmul.bf16.gmra.mxu0 %v458
    %v818 = vpop.f32.mrf.mxu0
    %v819 = vadd.f32 %v354, %v818
    %v820 = vpop.f32.mrf.mxu0
    %v821 = vadd.f32 %v359, %v820
    %822 = vmatmul.bf16.gmra.mxu0 %v459
    %v823 = vpop.f32.mrf.mxu0
    %v824 = vadd.f32 %v364, %v823
    %v825 = vpop.f32.mrf.mxu0
    %v826 = vadd.f32 %v369, %v825
    %827 = vmatmul.bf16.gmra.mxu0 %v460
    %v828 = vpop.f32.mrf.mxu0
    %v829 = vadd.f32 %v374, %v828
    %v830 = vpop.f32.mrf.mxu0
    %v831 = vadd.f32 %v379, %v830
    %832 = vdwg.mxu0
    %vm833 = vcmp.gt.f32.partialorder %v487, 0.0
    %vm834 = vcmp.gt.f32.partialorder %v576, 0.0
    %vm835 = vcmp.gt.f32.partialorder %v665, 0.0
    %vm836 = vcmp.gt.f32.partialorder %v754, 0.0
    %vm837 = vcmp.gt.f32.partialorder %v489, 0.0
    %vm838 = vcmp.gt.f32.partialorder %v578, 0.0
    %vm839 = vcmp.gt.f32.partialorder %v667, 0.0
    %vm840 = vcmp.gt.f32.partialorder %v756, 0.0
    %vm841 = vcmp.gt.f32.partialorder %v492, 0.0
    %vm842 = vcmp.gt.f32.partialorder %v581, 0.0
    %vm843 = vcmp.gt.f32.partialorder %v670, 0.0
    %vm844 = vcmp.gt.f32.partialorder %v759, 0.0
    %vm845 = vcmp.gt.f32.partialorder %v494, 0.0
    %vm846 = vcmp.gt.f32.partialorder %v583, 0.0
    %vm847 = vcmp.gt.f32.partialorder %v672, 0.0
    %vm848 = vcmp.gt.f32.partialorder %v761, 0.0
    %vm849 = vcmp.gt.f32.partialorder %v497, 0.0
    %vm850 = vcmp.gt.f32.partialorder %v586, 0.0
    %vm851 = vcmp.gt.f32.partialorder %v675, 0.0
    %vm852 = vcmp.gt.f32.partialorder %v764, 0.0
    %vm853 = vcmp.gt.f32.partialorder %v499, 0.0
    %vm854 = vcmp.gt.f32.partialorder %v588, 0.0
    %vm855 = vcmp.gt.f32.partialorder %v677, 0.0
    %vm856 = vcmp.gt.f32.partialorder %v766, 0.0
    %vm857 = vcmp.gt.f32.partialorder %v502, 0.0
    %vm858 = vcmp.gt.f32.partialorder %v591, 0.0
    %vm859 = vcmp.gt.f32.partialorder %v680, 0.0
    %vm860 = vcmp.gt.f32.partialorder %v769, 0.0
    %vm861 = vcmp.gt.f32.partialorder %v504, 0.0
    %vm862 = vcmp.gt.f32.partialorder %v593, 0.0
    %vm863 = vcmp.gt.f32.partialorder %v682, 0.0
    %vm864 = vcmp.gt.f32.partialorder %v771, 0.0
    %vm865 = vcmp.gt.f32.partialorder %v507, 0.0
    %vm866 = vcmp.gt.f32.partialorder %v596, 0.0
    %vm867 = vcmp.gt.f32.partialorder %v685, 0.0
    %vm868 = vcmp.gt.f32.partialorder %v774, 0.0
    %vm869 = vcmp.gt.f32.partialorder %v509, 0.0
    %vm870 = vcmp.gt.f32.partialorder %v598, 0.0
    %vm871 = vcmp.gt.f32.partialorder %v687, 0.0
    %vm872 = vcmp.gt.f32.partialorder %v776, 0.0
    %vm873 = vcmp.gt.f32.partialorder %v512, 0.0
    %vm874 = vcmp.gt.f32.partialorder %v601, 0.0
    %vm875 = vcmp.gt.f32.partialorder %v690, 0.0
    %vm876 = vcmp.gt.f32.partialorder %v779, 0.0
    %vm877 = vcmp.gt.f32.partialorder %v514, 0.0
    %vm878 = vcmp.gt.f32.partialorder %v603, 0.0
    %vm879 = vcmp.gt.f32.partialorder %v692, 0.0
    %vm880 = vcmp.gt.f32.partialorder %v781, 0.0
    %vm881 = vcmp.gt.f32.partialorder %v517, 0.0
    %vm882 = vcmp.gt.f32.partialorder %v606, 0.0
    %vm883 = vcmp.gt.f32.partialorder %v695, 0.0
    %vm884 = vcmp.gt.f32.partialorder %v784, 0.0
    %vm885 = vcmp.gt.f32.partialorder %v519, 0.0
    %vm886 = vcmp.gt.f32.partialorder %v608, 0.0
    %vm887 = vcmp.gt.f32.partialorder %v697, 0.0
    %vm888 = vcmp.gt.f32.partialorder %v786, 0.0
    %vm889 = vcmp.gt.f32.partialorder %v522, 0.0
    %vm890 = vcmp.gt.f32.partialorder %v611, 0.0
    %vm891 = vcmp.gt.f32.partialorder %v700, 0.0
    %vm892 = vcmp.gt.f32.partialorder %v789, 0.0
    %vm893 = vcmp.gt.f32.partialorder %v524, 0.0
    %vm894 = vcmp.gt.f32.partialorder %v613, 0.0
    %vm895 = vcmp.gt.f32.partialorder %v702, 0.0
    %vm896 = vcmp.gt.f32.partialorder %v791, 0.0
    %vm897 = vcmp.gt.f32.partialorder %v527, 0.0
    %vm898 = vcmp.gt.f32.partialorder %v616, 0.0
    %vm899 = vcmp.gt.f32.partialorder %v705, 0.0
    %vm900 = vcmp.gt.f32.partialorder %v794, 0.0
    %vm901 = vcmp.gt.f32.partialorder %v529, 0.0
    %vm902 = vcmp.gt.f32.partialorder %v618, 0.0
    %vm903 = vcmp.gt.f32.partialorder %v707, 0.0
    %vm904 = vcmp.gt.f32.partialorder %v796, 0.0
    %vm905 = vcmp.gt.f32.partialorder %v532, 0.0
    %vm906 = vcmp.gt.f32.partialorder %v621, 0.0
    %vm907 = vcmp.gt.f32.partialorder %v710, 0.0
    %vm908 = vcmp.gt.f32.partialorder %v799, 0.0
    %vm909 = vcmp.gt.f32.partialorder %v534, 0.0
    %vm910 = vcmp.gt.f32.partialorder %v623, 0.0
    %vm911 = vcmp.gt.f32.partialorder %v712, 0.0
    %vm912 = vcmp.gt.f32.partialorder %v801, 0.0
    %vm913 = vcmp.gt.f32.partialorder %v537, 0.0
    %vm914 = vcmp.gt.f32.partialorder %v626, 0.0
    %vm915 = vcmp.gt.f32.partialorder %v715, 0.0
    %vm916 = vcmp.gt.f32.partialorder %v804, 0.0
    %vm917 = vcmp.gt.f32.partialorder %v539, 0.0
    %vm918 = vcmp.gt.f32.partialorder %v628, 0.0
    %vm919 = vcmp.gt.f32.partialorder %v717, 0.0
    %vm920 = vcmp.gt.f32.partialorder %v806, 0.0
    %vm921 = vcmp.gt.f32.partialorder %v542, 0.0
    %vm922 = vcmp.gt.f32.partialorder %v631, 0.0
    %vm923 = vcmp.gt.f32.partialorder %v720, 0.0
    %vm924 = vcmp.gt.f32.partialorder %v809, 0.0
    %vm925 = vcmp.gt.f32.partialorder %v544, 0.0
    %vm926 = vcmp.gt.f32.partialorder %v633, 0.0
    %vm927 = vcmp.gt.f32.partialorder %v722, 0.0
    %vm928 = vcmp.gt.f32.partialorder %v811, 0.0
    %vm929 = vcmp.gt.f32.partialorder %v547, 0.0
    %vm930 = vcmp.gt.f32.partialorder %v636, 0.0
    %vm931 = vcmp.gt.f32.partialorder %v725, 0.0
    %vm932 = vcmp.gt.f32.partialorder %v814, 0.0
    %vm933 = vcmp.gt.f32.partialorder %v549, 0.0
    %vm934 = vcmp.gt.f32.partialorder %v638, 0.0
    %vm935 = vcmp.gt.f32.partialorder %v727, 0.0
    %vm936 = vcmp.gt.f32.partialorder %v816, 0.0
    %vm937 = vcmp.gt.f32.partialorder %v552, 0.0
    %vm938 = vcmp.gt.f32.partialorder %v641, 0.0
    %vm939 = vcmp.gt.f32.partialorder %v730, 0.0
    %vm940 = vcmp.gt.f32.partialorder %v819, 0.0
    %vm941 = vcmp.gt.f32.partialorder %v554, 0.0
    %vm942 = vcmp.gt.f32.partialorder %v643, 0.0
    %vm943 = vcmp.gt.f32.partialorder %v732, 0.0
    %vm944 = vcmp.gt.f32.partialorder %v821, 0.0
    %vm945 = vcmp.gt.f32.partialorder %v557, 0.0
    %vm946 = vcmp.gt.f32.partialorder %v646, 0.0
    %vm947 = vcmp.gt.f32.partialorder %v735, 0.0
    %vm948 = vcmp.gt.f32.partialorder %v824, 0.0
    %vm949 = vcmp.gt.f32.partialorder %v559, 0.0
    %vm950 = vcmp.gt.f32.partialorder %v648, 0.0
    %vm951 = vcmp.gt.f32.partialorder %v737, 0.0
    %vm952 = vcmp.gt.f32.partialorder %v826, 0.0
    %vm953 = vcmp.gt.f32.partialorder %v562, 0.0
    %vm954 = vcmp.gt.f32.partialorder %v651, 0.0
    %vm955 = vcmp.gt.f32.partialorder %v740, 0.0
    %vm956 = vcmp.gt.f32.partialorder %v829, 0.0
    %vm957 = vcmp.gt.f32.partialorder %v564, 0.0
    %vm958 = vcmp.gt.f32.partialorder %v653, 0.0
    %vm959 = vcmp.gt.f32.partialorder %v742, 0.0
    %vm960 = vcmp.gt.f32.partialorder %v831, 0.0
    %v961 = vmul.f32 %v487, 0.2
    %v962 = vmul.f32 %v576, 0.2
    %v963 = vmul.f32 %v665, 0.2
    %v964 = vmul.f32 %v754, 0.2
    %v965 = vmul.f32 %v489, 0.2
    %v966 = vmul.f32 %v578, 0.2
    %v967 = vmul.f32 %v667, 0.2
    %v968 = vmul.f32 %v756, 0.2
    %v969 = vmul.f32 %v492, 0.2
    %v970 = vmul.f32 %v581, 0.2
    %v971 = vmul.f32 %v670, 0.2
    %v972 = vmul.f32 %v759, 0.2
    %v973 = vmul.f32 %v494, 0.2
    %v974 = vmul.f32 %v583, 0.2
    %v975 = vmul.f32 %v672, 0.2
    %v976 = vmul.f32 %v761, 0.2
    %v977 = vmul.f32 %v497, 0.2
    %v978 = vmul.f32 %v586, 0.2
    %v979 = vmul.f32 %v675, 0.2
    %v980 = vmul.f32 %v764, 0.2
    %v981 = vmul.f32 %v499, 0.2
    %v982 = vmul.f32 %v588, 0.2
    %v983 = vmul.f32 %v677, 0.2
    %v984 = vmul.f32 %v766, 0.2
    %v985 = vmul.f32 %v502, 0.2
    %v986 = vmul.f32 %v591, 0.2
    %v987 = vmul.f32 %v680, 0.2
    %v988 = vmul.f32 %v769, 0.2
    %v989 = vmul.f32 %v504, 0.2
    %v990 = vmul.f32 %v593, 0.2
    %v991 = vmul.f32 %v682, 0.2
    %v992 = vmul.f32 %v771, 0.2
    %v993 = vmul.f32 %v507, 0.2
    %v994 = vmul.f32 %v596, 0.2
    %v995 = vmul.f32 %v685, 0.2
    %v996 = vmul.f32 %v774, 0.2
    %v997 = vmul.f32 %v509, 0.2
    %v998 = vmul.f32 %v598, 0.2
    %v999 = vmul.f32 %v687, 0.2
    %v1000 = vmul.f32 %v776, 0.2
    %v1001 = vmul.f32 %v512, 0.2
    %v1002 = vmul.f32 %v601, 0.2
    %v1003 = vmul.f32 %v690, 0.2
    %v1004 = vmul.f32 %v779, 0.2
    %v1005 = vmul.f32 %v514, 0.2
    %v1006 = vmul.f32 %v603, 0.2
    %v1007 = vmul.f32 %v692, 0.2
    %v1008 = vmul.f32 %v781, 0.2
    %v1009 = vmul.f32 %v517, 0.2
    %v1010 = vmul.f32 %v606, 0.2
    %v1011 = vmul.f32 %v695, 0.2
    %v1012 = vmul.f32 %v784, 0.2
    %v1013 = vmul.f32 %v519, 0.2
    %v1014 = vmul.f32 %v608, 0.2
    %v1015 = vmul.f32 %v697, 0.2
    %v1016 = vmul.f32 %v786, 0.2
    %v1017 = vmul.f32 %v522, 0.2
    %v1018 = vmul.f32 %v611, 0.2
    %v1019 = vmul.f32 %v700, 0.2
    %v1020 = vmul.f32 %v789, 0.2
    %v1021 = vmul.f32 %v524, 0.2
    %v1022 = vmul.f32 %v613, 0.2
    %v1023 = vmul.f32 %v702, 0.2
    %v1024 = vmul.f32 %v791, 0.2
    %v1025 = vmul.f32 %v527, 0.2
    %v1026 = vmul.f32 %v616, 0.2
    %v1027 = vmul.f32 %v705, 0.2
    %v1028 = vmul.f32 %v794, 0.2
    %v1029 = vmul.f32 %v529, 0.2
    %v1030 = vmul.f32 %v618, 0.2
    %v1031 = vmul.f32 %v707, 0.2
    %v1032 = vmul.f32 %v796, 0.2
    %v1033 = vmul.f32 %v532, 0.2
    %v1034 = vmul.f32 %v621, 0.2
    %v1035 = vmul.f32 %v710, 0.2
    %v1036 = vmul.f32 %v799, 0.2
    %v1037 = vmul.f32 %v534, 0.2
    %v1038 = vmul.f32 %v623, 0.2
    %v1039 = vmul.f32 %v712, 0.2
    %v1040 = vmul.f32 %v801, 0.2
    %v1041 = vmul.f32 %v537, 0.2
    %v1042 = vmul.f32 %v626, 0.2
    %v1043 = vmul.f32 %v715, 0.2
    %v1044 = vmul.f32 %v804, 0.2
    %v1045 = vmul.f32 %v539, 0.2
    %v1046 = vmul.f32 %v628, 0.2
    %v1047 = vmul.f32 %v717, 0.2
    %v1048 = vmul.f32 %v806, 0.2
    %v1049 = vmul.f32 %v542, 0.2
    %v1050 = vmul.f32 %v631, 0.2
    %v1051 = vmul.f32 %v720, 0.2
    %v1052 = vmul.f32 %v809, 0.2
    %v1053 = vmul.f32 %v544, 0.2
    %v1054 = vmul.f32 %v633, 0.2
    %v1055 = vmul.f32 %v722, 0.2
    %v1056 = vmul.f32 %v811, 0.2
    %v1057 = vmul.f32 %v547, 0.2
    %v1058 = vmul.f32 %v636, 0.2
    %v1059 = vmul.f32 %v725, 0.2
    %v1060 = vmul.f32 %v814, 0.2
    %v1061 = vmul.f32 %v549, 0.2
    %v1062 = vmul.f32 %v638, 0.2
    %v1063 = vmul.f32 %v727, 0.2
    %v1064 = vmul.f32 %v816, 0.2
    %v1065 = vmul.f32 %v552, 0.2
    %v1066 = vmul.f32 %v641, 0.2
    %v1067 = vmul.f32 %v730, 0.2
    %v1068 = vmul.f32 %v819, 0.2
    %v1069 = vmul.f32 %v554, 0.2
    %v1070 = vmul.f32 %v643, 0.2
    %v1071 = vmul.f32 %v732, 0.2
    %v1072 = vmul.f32 %v821, 0.2
    %v1073 = vmul.f32 %v557, 0.2
    %v1074 = vmul.f32 %v646, 0.2
    %v1075 = vmul.f32 %v735, 0.2
    %v1076 = vmul.f32 %v824, 0.2
    %v1077 = vmul.f32 %v559, 0.2
    %v1078 = vmul.f32 %v648, 0.2
    %v1079 = vmul.f32 %v737, 0.2
    %v1080 = vmul.f32 %v826, 0.2
    %v1081 = vmul.f32 %v562, 0.2
    %v1082 = vmul.f32 %v651, 0.2
    %v1083 = vmul.f32 %v740, 0.2
    %v1084 = vmul.f32 %v829, 0.2
    %v1085 = vmul.f32 %v564, 0.2
    %v1086 = vmul.f32 %v653, 0.2
    %v1087 = vmul.f32 %v742, 0.2
    %v1088 = vmul.f32 %v831, 0.2
    %v1089 = vsel %vm833, %v487, %v961
    %v1090 = vsel %vm834, %v576, %v962
    %v1091 = vsel %vm835, %v665, %v963
    %v1092 = vsel %vm836, %v754, %v964
    %v1093 = vsel %vm837, %v489, %v965
    %v1094 = vsel %vm838, %v578, %v966
    %v1095 = vsel %vm839, %v667, %v967
    %v1096 = vsel %vm840, %v756, %v968
    %v1097 = vsel %vm841, %v492, %v969
    %v1098 = vsel %vm842, %v581, %v970
    %v1099 = vsel %vm843, %v670, %v971
    %v1100 = vsel %vm844, %v759, %v972
    %v1101 = vsel %vm845, %v494, %v973
    %v1102 = vsel %vm846, %v583, %v974
    %v1103 = vsel %vm847, %v672, %v975
    %v1104 = vsel %vm848, %v761, %v976
    %v1105 = vsel %vm849, %v497, %v977
    %v1106 = vsel %vm850, %v586, %v978
    %v1107 = vsel %vm851, %v675, %v979
    %v1108 = vsel %vm852, %v764, %v980
    %v1109 = vsel %vm853, %v499, %v981
    %v1110 = vsel %vm854, %v588, %v982
    %v1111 = vsel %vm855, %v677, %v983
    %v1112 = vsel %vm856, %v766, %v984
    %v1113 = vsel %vm857, %v502, %v985
    %v1114 = vsel %vm858, %v591, %v986
    %v1115 = vsel %vm859, %v680, %v987
    %v1116 = vsel %vm860, %v769, %v988
    %v1117 = vsel %vm861, %v504, %v989
    %v1118 = vsel %vm862, %v593, %v990
    %v1119 = vsel %vm863, %v682, %v991
    %v1120 = vsel %vm864, %v771, %v992
    %v1121 = vsel %vm865, %v507, %v993
    %v1122 = vsel %vm866, %v596, %v994
    %v1123 = vsel %vm867, %v685, %v995
    %v1124 = vsel %vm868, %v774, %v996
    %v1125 = vsel %vm869, %v509, %v997
    %v1126 = vsel %vm870, %v598, %v998
    %v1127 = vsel %vm871, %v687, %v999
    %v1128 = vsel %vm872, %v776, %v1000
    %v1129 = vsel %vm873, %v512, %v1001
    %v1130 = vsel %vm874, %v601, %v1002
    %v1131 = vsel %vm875, %v690, %v1003
    %v1132 = vsel %vm876, %v779, %v1004
    %v1133 = vsel %vm877, %v514, %v1005
    %v1134 = vsel %vm878, %v603, %v1006
    %v1135 = vsel %vm879, %v692, %v1007
    %v1136 = vsel %vm880, %v781, %v1008
    %v1137 = vsel %vm881, %v517, %v1009
    %v1138 = vsel %vm882, %v606, %v1010
    %v1139 = vsel %vm883, %v695, %v1011
    %v1140 = vsel %vm884, %v784, %v1012
    %v1141 = vsel %vm885, %v519, %v1013
    %v1142 = vsel %vm886, %v608, %v1014
    %v1143 = vsel %vm887, %v697, %v1015
    %v1144 = vsel %vm888, %v786, %v1016
    %v1145 = vsel %vm889, %v522, %v1017
    %v1146 = vsel %vm890, %v611, %v1018
    %v1147 = vsel %vm891, %v700, %v1019
    %v1148 = vsel %vm892, %v789, %v1020
    %v1149 = vsel %vm893, %v524, %v1021
    %v1150 = vsel %vm894, %v613, %v1022
    %v1151 = vsel %vm895, %v702, %v1023
    %v1152 = vsel %vm896, %v791, %v1024
    %v1153 = vsel %vm897, %v527, %v1025
    %v1154 = vsel %vm898, %v616, %v1026
    %v1155 = vsel %vm899, %v705, %v1027
    %v1156 = vsel %vm900, %v794, %v1028
    %v1157 = vsel %vm901, %v529, %v1029
    %v1158 = vsel %vm902, %v618, %v1030
    %v1159 = vsel %vm903, %v707, %v1031
    %v1160 = vsel %vm904, %v796, %v1032
    %v1161 = vsel %vm905, %v532, %v1033
    %v1162 = vsel %vm906, %v621, %v1034
    %v1163 = vsel %vm907, %v710, %v1035
    %v1164 = vsel %vm908, %v799, %v1036
    %v1165 = vsel %vm909, %v534, %v1037
    %v1166 = vsel %vm910, %v623, %v1038
    %v1167 = vsel %vm911, %v712, %v1039
    %v1168 = vsel %vm912, %v801, %v1040
    %v1169 = vsel %vm913, %v537, %v1041
    %v1170 = vsel %vm914, %v626, %v1042
    %v1171 = vsel %vm915, %v715, %v1043
    %v1172 = vsel %vm916, %v804, %v1044
    %v1173 = vsel %vm917, %v539, %v1045
    %v1174 = vsel %vm918, %v628, %v1046
    %v1175 = vsel %vm919, %v717, %v1047
    %v1176 = vsel %vm920, %v806, %v1048
    %v1177 = vsel %vm921, %v542, %v1049
    %v1178 = vsel %vm922, %v631, %v1050
    %v1179 = vsel %vm923, %v720, %v1051
    %v1180 = vsel %vm924, %v809, %v1052
    %v1181 = vsel %vm925, %v544, %v1053
    %v1182 = vsel %vm926, %v633, %v1054
    %v1183 = vsel %vm927, %v722, %v1055
    %v1184 = vsel %vm928, %v811, %v1056
    %v1185 = vsel %vm929, %v547, %v1057
    %v1186 = vsel %vm930, %v636, %v1058
    %v1187 = vsel %vm931, %v725, %v1059
    %v1188 = vsel %vm932, %v814, %v1060
    %v1189 = vsel %vm933, %v549, %v1061
    %v1190 = vsel %vm934, %v638, %v1062
    %v1191 = vsel %vm935, %v727, %v1063
    %v1192 = vsel %vm936, %v816, %v1064
    %v1193 = vsel %vm937, %v552, %v1065
    %v1194 = vsel %vm938, %v641, %v1066
    %v1195 = vsel %vm939, %v730, %v1067
    %v1196 = vsel %vm940, %v819, %v1068
    %v1197 = vsel %vm941, %v554, %v1069
    %v1198 = vsel %vm942, %v643, %v1070
    %v1199 = vsel %vm943, %v732, %v1071
    %v1200 = vsel %vm944, %v821, %v1072
    %v1201 = vsel %vm945, %v557, %v1073
    %v1202 = vsel %vm946, %v646, %v1074
    %v1203 = vsel %vm947, %v735, %v1075
    %v1204 = vsel %vm948, %v824, %v1076
    %v1205 = vsel %vm949, %v559, %v1077
    %v1206 = vsel %vm950, %v648, %v1078
    %v1207 = vsel %vm951, %v737, %v1079
    %v1208 = vsel %vm952, %v826, %v1080
    %v1209 = vsel %vm953, %v562, %v1081
    %v1210 = vsel %vm954, %v651, %v1082
    %v1211 = vsel %vm955, %v740, %v1083
    %v1212 = vsel %vm956, %v829, %v1084
    %v1213 = vsel %vm957, %v564, %v1085
    %v1214 = vsel %vm958, %v653, %v1086
    %v1215 = vsel %vm959, %v742, %v1087
    %v1216 = vsel %vm960, %v831, %v1088
    %v1217 = vld [vmem:[#allocation6] sm:$0xff]
    %v1218 = vld [vmem:[#allocation6 + $0x8] sm:$0xff]
    %v1219 = vld [vmem:[#allocation6 + $0x10] sm:$0xff]
    %v1220 = vld [vmem:[#allocation6 + $0x18] sm:$0xff]
    %v1221 = vld [vmem:[#allocation6 + $0x20] sm:$0xff]
    %v1222 = vld [vmem:[#allocation6 + $0x28] sm:$0xff]
    %v1223 = vld [vmem:[#allocation6 + $0x30] sm:$0xff]
    %v1224 = vld [vmem:[#allocation6 + $0x38] sm:$0xff]
    %v1225 = vld [vmem:[#allocation6 + $0x40] sm:$0xff]
    %v1226 = vld [vmem:[#allocation6 + $0x48] sm:$0xff]
    %v1227 = vld [vmem:[#allocation6 + $0x50] sm:$0xff]
    %v1228 = vld [vmem:[#allocation6 + $0x58] sm:$0xff]
    %v1229 = vld [vmem:[#allocation6 + $0x60] sm:$0xff]
    %v1230 = vld [vmem:[#allocation6 + $0x68] sm:$0xff]
    %v1231 = vld [vmem:[#allocation6 + $0x70] sm:$0xff]
    %v1232 = vld [vmem:[#allocation6 + $0x78] sm:$0xff]
    %v1233 = vld [vmem:[#allocation6 + $0x80] sm:$0xff]
    %v1234 = vld [vmem:[#allocation6 + $0x88] sm:$0xff]
    %v1235 = vld [vmem:[#allocation6 + $0x90] sm:$0xff]
    %v1236 = vld [vmem:[#allocation6 + $0x98] sm:$0xff]
    %v1237 = vld [vmem:[#allocation6 + $0xa0] sm:$0xff]
    %v1238 = vld [vmem:[#allocation6 + $0xa8] sm:$0xff]
    %v1239 = vld [vmem:[#allocation6 + $0xb0] sm:$0xff]
    %v1240 = vld [vmem:[#allocation6 + $0xb8] sm:$0xff]
    %v1241 = vld [vmem:[#allocation6 + $0xc0] sm:$0xff]
    %v1242 = vld [vmem:[#allocation6 + $0xc8] sm:$0xff]
    %v1243 = vld [vmem:[#allocation6 + $0xd0] sm:$0xff]
    %v1244 = vld [vmem:[#allocation6 + $0xd8] sm:$0xff]
    %v1245 = vld [vmem:[#allocation6 + $0xe0] sm:$0xff]
    %v1246 = vld [vmem:[#allocation6 + $0xe8] sm:$0xff]
    %v1247 = vld [vmem:[#allocation6 + $0xf0] sm:$0xff]
    %v1248 = vld [vmem:[#allocation6 + $0xf8] sm:$0xff]
    %v1249 = vpack.c.bf16 %v1093, %v1089
    %v1250 = vpack.c.bf16 %v1094, %v1090
    %v1251 = vpack.c.bf16 %v1095, %v1091
    %v1252 = vpack.c.bf16 %v1096, %v1092
    %v1253 = vpack.c.bf16 %v1101, %v1097
    %v1254 = vpack.c.bf16 %v1102, %v1098
    %v1255 = vpack.c.bf16 %v1103, %v1099
    %v1256 = vpack.c.bf16 %v1104, %v1100
    %v1257 = vpack.c.bf16 %v1109, %v1105
    %v1258 = vpack.c.bf16 %v1110, %v1106
    %v1259 = vpack.c.bf16 %v1111, %v1107
    %v1260 = vpack.c.bf16 %v1112, %v1108
    %v1261 = vpack.c.bf16 %v1117, %v1113
    %v1262 = vpack.c.bf16 %v1118, %v1114
    %v1263 = vpack.c.bf16 %v1119, %v1115
    %v1264 = vpack.c.bf16 %v1120, %v1116
    %v1265 = vpack.c.bf16 %v1125, %v1121
    %v1266 = vpack.c.bf16 %v1126, %v1122
    %v1267 = vpack.c.bf16 %v1127, %v1123
    %v1268 = vpack.c.bf16 %v1128, %v1124
    %v1269 = vpack.c.bf16 %v1133, %v1129
    %v1270 = vpack.c.bf16 %v1134, %v1130
    %v1271 = vpack.c.bf16 %v1135, %v1131
    %v1272 = vpack.c.bf16 %v1136, %v1132
    %v1273 = vpack.c.bf16 %v1141, %v1137
    %v1274 = vpack.c.bf16 %v1142, %v1138
    %v1275 = vpack.c.bf16 %v1143, %v1139
    %v1276 = vpack.c.bf16 %v1144, %v1140
    %v1277 = vpack.c.bf16 %v1149, %v1145
    %v1278 = vpack.c.bf16 %v1150, %v1146
    %v1279 = vpack.c.bf16 %v1151, %v1147
    %v1280 = vpack.c.bf16 %v1152, %v1148
    %v1281 = vpack.c.bf16 %v1157, %v1153
    %v1282 = vpack.c.bf16 %v1158, %v1154
    %v1283 = vpack.c.bf16 %v1159, %v1155
    %v1284 = vpack.c.bf16 %v1160, %v1156
    %v1285 = vpack.c.bf16 %v1165, %v1161
    %v1286 = vpack.c.bf16 %v1166, %v1162
    %v1287 = vpack.c.bf16 %v1167, %v1163
    %v1288 = vpack.c.bf16 %v1168, %v1164
    %v1289 = vpack.c.bf16 %v1173, %v1169
    %v1290 = vpack.c.bf16 %v1174, %v1170
    %v1291 = vpack.c.bf16 %v1175, %v1171
    %v1292 = vpack.c.bf16 %v1176, %v1172
    %v1293 = vpack.c.bf16 %v1181, %v1177
    %v1294 = vpack.c.bf16 %v1182, %v1178
    %v1295 = vpack.c.bf16 %v1183, %v1179
    %v1296 = vpack.c.bf16 %v1184, %v1180
    %v1297 = vpack.c.bf16 %v1189, %v1185
    %v1298 = vpack.c.bf16 %v1190, %v1186
    %v1299 = vpack.c.bf16 %v1191, %v1187
    %v1300 = vpack.c.bf16 %v1192, %v1188
    %v1301 = vpack.c.bf16 %v1197, %v1193
    %v1302 = vpack.c.bf16 %v1198, %v1194
    %v1303 = vpack.c.bf16 %v1199, %v1195
    %v1304 = vpack.c.bf16 %v1200, %v1196
    %v1305 = vpack.c.bf16 %v1205, %v1201
    %v1306 = vpack.c.bf16 %v1206, %v1202
    %v1307 = vpack.c.bf16 %v1207, %v1203
    %v1308 = vpack.c.bf16 %v1208, %v1204
    %v1309 = vpack.c.bf16 %v1213, %v1209
    %v1310 = vpack.c.bf16 %v1214, %v1210
    %v1311 = vpack.c.bf16 %v1215, %v1211
    %v1312 = vpack.c.bf16 %v1216, %v1212
    %v1313 = vld [vmem:[%s4] sm:$0xff]
    %v1314 = vld [vmem:[%s4 + $0x8] sm:$0xff]
    %v1315 = vld [vmem:[%s4 + $0x10] sm:$0xff]
    %v1316 = vld [vmem:[%s4 + $0x18] sm:$0xff]
    %v1317 = vld [vmem:[%s4 + $0x20] sm:$0xff]
    %v1318 = vld [vmem:[%s4 + $0x28] sm:$0xff]
    %v1319 = vld [vmem:[%s4 + $0x30] sm:$0xff]
    %v1320 = vld [vmem:[%s4 + $0x38] sm:$0xff]
    %v1321 = vld [vmem:[%s4 + $0x40] sm:$0xff]
    %v1322 = vld [vmem:[%s4 + $0x48] sm:$0xff]
    %v1323 = vld [vmem:[%s4 + $0x50] sm:$0xff]
    %v1324 = vld [vmem:[%s4 + $0x58] sm:$0xff]
    %v1325 = vld [vmem:[%s4 + $0x60] sm:$0xff]
    %v1326 = vld [vmem:[%s4 + $0x68] sm:$0xff]
    %v1327 = vld [vmem:[%s4 + $0x70] sm:$0xff]
    %v1328 = vld [vmem:[%s4 + $0x78] sm:$0xff]
    %v1329 = vld [vmem:[%s4 + $0x80] sm:$0xff]
    %v1330 = vld [vmem:[%s4 + $0x88] sm:$0xff]
    %v1331 = vld [vmem:[%s4 + $0x90] sm:$0xff]
    %v1332 = vld [vmem:[%s4 + $0x98] sm:$0xff]
    %v1333 = vld [vmem:[%s4 + $0xa0] sm:$0xff]
    %v1334 = vld [vmem:[%s4 + $0xa8] sm:$0xff]
    %v1335 = vld [vmem:[%s4 + $0xb0] sm:$0xff]
    %v1336 = vld [vmem:[%s4 + $0xb8] sm:$0xff]
    %v1337 = vld [vmem:[%s4 + $0xc0] sm:$0xff]
    %v1338 = vld [vmem:[%s4 + $0xc8] sm:$0xff]
    %v1339 = vld [vmem:[%s4 + $0xd0] sm:$0xff]
    %v1340 = vld [vmem:[%s4 + $0xd8] sm:$0xff]
    %v1341 = vld [vmem:[%s4 + $0xe0] sm:$0xff]
    %v1342 = vld [vmem:[%s4 + $0xe8] sm:$0xff]
    %v1343 = vld [vmem:[%s4 + $0xf0] sm:$0xff]
    %v1344 = vld [vmem:[%s4 + $0xf8] sm:$0xff]
    %1346 = vset.pattern.permute.xlu0 0
    %1347 = vperm.xlu0 %1346, %v1313
    %v1348 = vpop.permute.xlu0 %1347
    %1351 = vset.pattern.permute.xlu0 0
    %1352 = vperm.xlu0 %1351, %v1314
    %v1353 = vpop.permute.xlu0 %1352
    %1356 = vset.pattern.permute.xlu0 0
    %1357 = vperm.xlu0 %1356, %v1315
    %v1358 = vpop.permute.xlu0 %1357
    %1361 = vset.pattern.permute.xlu0 0
    %1362 = vperm.xlu0 %1361, %v1316
    %v1363 = vpop.permute.xlu0 %1362
    %1366 = vset.pattern.permute.xlu0 0
    %1367 = vperm.xlu0 %1366, %v1317
    %v1368 = vpop.permute.xlu0 %1367
    %1371 = vset.pattern.permute.xlu0 0
    %1372 = vperm.xlu0 %1371, %v1318
    %v1373 = vpop.permute.xlu0 %1372
    %1376 = vset.pattern.permute.xlu0 0
    %1377 = vperm.xlu0 %1376, %v1319
    %v1378 = vpop.permute.xlu0 %1377
    %1381 = vset.pattern.permute.xlu0 0
    %1382 = vperm.xlu0 %1381, %v1320
    %v1383 = vpop.permute.xlu0 %1382
    %1386 = vset.pattern.permute.xlu0 0
    %1387 = vperm.xlu0 %1386, %v1321
    %v1388 = vpop.permute.xlu0 %1387
    %1391 = vset.pattern.permute.xlu0 0
    %1392 = vperm.xlu0 %1391, %v1322
    %v1393 = vpop.permute.xlu0 %1392
    %1396 = vset.pattern.permute.xlu0 0
    %1397 = vperm.xlu0 %1396, %v1323
    %v1398 = vpop.permute.xlu0 %1397
    %1401 = vset.pattern.permute.xlu0 0
    %1402 = vperm.xlu0 %1401, %v1324
    %v1403 = vpop.permute.xlu0 %1402
    %1406 = vset.pattern.permute.xlu0 0
    %1407 = vperm.xlu0 %1406, %v1325
    %v1408 = vpop.permute.xlu0 %1407
    %1411 = vset.pattern.permute.xlu0 0
    %1412 = vperm.xlu0 %1411, %v1326
    %v1413 = vpop.permute.xlu0 %1412
    %1416 = vset.pattern.permute.xlu0 0
    %1417 = vperm.xlu0 %1416, %v1327
    %v1418 = vpop.permute.xlu0 %1417
    %1421 = vset.pattern.permute.xlu0 0
    %1422 = vperm.xlu0 %1421, %v1328
    %v1423 = vpop.permute.xlu0 %1422
    %1426 = vset.pattern.permute.xlu0 0
    %1427 = vperm.xlu0 %1426, %v1329
    %v1428 = vpop.permute.xlu0 %1427
    %1431 = vset.pattern.permute.xlu0 0
    %1432 = vperm.xlu0 %1431, %v1330
    %v1433 = vpop.permute.xlu0 %1432
    %1436 = vset.pattern.permute.xlu0 0
    %1437 = vperm.xlu0 %1436, %v1331
    %v1438 = vpop.permute.xlu0 %1437
    %1441 = vset.pattern.permute.xlu0 0
    %1442 = vperm.xlu0 %1441, %v1332
    %v1443 = vpop.permute.xlu0 %1442
    %1446 = vset.pattern.permute.xlu0 0
    %1447 = vperm.xlu0 %1446, %v1333
    %v1448 = vpop.permute.xlu0 %1447
    %1451 = vset.pattern.permute.xlu0 0
    %1452 = vperm.xlu0 %1451, %v1334
    %v1453 = vpop.permute.xlu0 %1452
    %1456 = vset.pattern.permute.xlu0 0
    %1457 = vperm.xlu0 %1456, %v1335
    %v1458 = vpop.permute.xlu0 %1457
    %1461 = vset.pattern.permute.xlu0 0
    %1462 = vperm.xlu0 %1461, %v1336
    %v1463 = vpop.permute.xlu0 %1462
    %1466 = vset.pattern.permute.xlu0 0
    %1467 = vperm.xlu0 %1466, %v1337
    %v1468 = vpop.permute.xlu0 %1467
    %1471 = vset.pattern.permute.xlu0 0
    %1472 = vperm.xlu0 %1471, %v1338
    %v1473 = vpop.permute.xlu0 %1472
    %1476 = vset.pattern.permute.xlu0 0
    %1477 = vperm.xlu0 %1476, %v1339
    %v1478 = vpop.permute.xlu0 %1477
    %1481 = vset.pattern.permute.xlu0 0
    %1482 = vperm.xlu0 %1481, %v1340
    %v1483 = vpop.permute.xlu0 %1482
    %1486 = vset.pattern.permute.xlu0 0
    %1487 = vperm.xlu0 %1486, %v1341
    %v1488 = vpop.permute.xlu0 %1487
    %1491 = vset.pattern.permute.xlu0 0
    %1492 = vperm.xlu0 %1491, %v1342
    %v1493 = vpop.permute.xlu0 %1492
    %1496 = vset.pattern.permute.xlu0 0
    %1497 = vperm.xlu0 %1496, %v1343
    %v1498 = vpop.permute.xlu0 %1497
    %1501 = vset.pattern.permute.xlu0 0
    %1502 = vperm.xlu0 %1501, %v1344
    %v1503 = vpop.permute.xlu0 %1502
    %v1537 = vunpack.c.l.b16 %v1217
    %v1538 = vunpack.c.h.b16 %v1217
    %v1539 = vunpack.c.l.b16 %v1218
    %v1540 = vunpack.c.h.b16 %v1218
    %v1541 = vunpack.c.l.b16 %v1219
    %v1542 = vunpack.c.h.b16 %v1219
    %v1543 = vunpack.c.l.b16 %v1220
    %v1544 = vunpack.c.h.b16 %v1220
    %v1545 = vunpack.c.l.b16 %v1221
    %v1546 = vunpack.c.h.b16 %v1221
    %v1547 = vunpack.c.l.b16 %v1222
    %v1548 = vunpack.c.h.b16 %v1222
    %v1549 = vunpack.c.l.b16 %v1223
    %v1550 = vunpack.c.h.b16 %v1223
    %v1551 = vunpack.c.l.b16 %v1224
    %v1552 = vunpack.c.h.b16 %v1224
    %v1553 = vunpack.c.l.b16 %v1225
    %v1554 = vunpack.c.h.b16 %v1225
    %v1555 = vunpack.c.l.b16 %v1226
    %v1556 = vunpack.c.h.b16 %v1226
    %v1557 = vunpack.c.l.b16 %v1227
    %v1558 = vunpack.c.h.b16 %v1227
    %v1559 = vunpack.c.l.b16 %v1228
    %v1560 = vunpack.c.h.b16 %v1228
    %v1561 = vunpack.c.l.b16 %v1229
    %v1562 = vunpack.c.h.b16 %v1229
    %v1563 = vunpack.c.l.b16 %v1230
    %v1564 = vunpack.c.h.b16 %v1230
    %v1565 = vunpack.c.l.b16 %v1231
    %v1566 = vunpack.c.h.b16 %v1231
    %v1567 = vunpack.c.l.b16 %v1232
    %v1568 = vunpack.c.h.b16 %v1232
    %v1569 = vunpack.c.l.b16 %v1233
    %v1570 = vunpack.c.h.b16 %v1233
    %v1571 = vunpack.c.l.b16 %v1234
    %v1572 = vunpack.c.h.b16 %v1234
    %v1573 = vunpack.c.l.b16 %v1235
    %v1574 = vunpack.c.h.b16 %v1235
    %v1575 = vunpack.c.l.b16 %v1236
    %v1576 = vunpack.c.h.b16 %v1236
    %v1577 = vunpack.c.l.b16 %v1237
    %v1578 = vunpack.c.h.b16 %v1237
    %v1579 = vunpack.c.l.b16 %v1238
    %v1580 = vunpack.c.h.b16 %v1238
    %v1581 = vunpack.c.l.b16 %v1239
    %v1582 = vunpack.c.h.b16 %v1239
    %v1583 = vunpack.c.l.b16 %v1240
    %v1584 = vunpack.c.h.b16 %v1240
    %v1585 = vunpack.c.l.b16 %v1241
    %v1586 = vunpack.c.h.b16 %v1241
    %v1587 = vunpack.c.l.b16 %v1242
    %v1588 = vunpack.c.h.b16 %v1242
    %v1589 = vunpack.c.l.b16 %v1243
    %v1590 = vunpack.c.h.b16 %v1243
    %v1591 = vunpack.c.l.b16 %v1244
    %v1592 = vunpack.c.h.b16 %v1244
    %v1593 = vunpack.c.l.b16 %v1245
    %v1594 = vunpack.c.h.b16 %v1245
    %v1595 = vunpack.c.l.b16 %v1246
    %v1596 = vunpack.c.h.b16 %v1246
    %v1597 = vunpack.c.l.b16 %v1247
    %v1598 = vunpack.c.h.b16 %v1247
    %v1599 = vunpack.c.l.b16 %v1248
    %v1600 = vunpack.c.h.b16 %v1248
    %v1601 = vpack.c.b16 %v1539, %v1537
    %v1602 = vpack.c.b16 %v1540, %v1538
    %v1603 = vpack.c.b16 %v1543, %v1541
    %v1604 = vpack.c.b16 %v1544, %v1542
    %v1605 = vpack.c.b16 %v1547, %v1545
    %v1606 = vpack.c.b16 %v1548, %v1546
    %v1607 = vpack.c.b16 %v1551, %v1549
    %v1608 = vpack.c.b16 %v1552, %v1550
    %v1609 = vpack.c.b16 %v1555, %v1553
    %v1610 = vpack.c.b16 %v1556, %v1554
    %v1611 = vpack.c.b16 %v1559, %v1557
    %v1612 = vpack.c.b16 %v1560, %v1558
    %v1613 = vpack.c.b16 %v1563, %v1561
    %v1614 = vpack.c.b16 %v1564, %v1562
    %v1615 = vpack.c.b16 %v1567, %v1565
    %v1616 = vpack.c.b16 %v1568, %v1566
    %v1617 = vpack.c.b16 %v1571, %v1569
    %v1618 = vpack.c.b16 %v1572, %v1570
    %v1619 = vpack.c.b16 %v1575, %v1573
    %v1620 = vpack.c.b16 %v1576, %v1574
    %v1621 = vpack.c.b16 %v1579, %v1577
    %v1622 = vpack.c.b16 %v1580, %v1578
    %v1623 = vpack.c.b16 %v1583, %v1581
    %v1624 = vpack.c.b16 %v1584, %v1582
    %v1625 = vpack.c.b16 %v1587, %v1585
    %v1626 = vpack.c.b16 %v1588, %v1586
    %v1627 = vpack.c.b16 %v1591, %v1589
    %v1628 = vpack.c.b16 %v1592, %v1590
    %v1629 = vpack.c.b16 %v1595, %v1593
    %v1630 = vpack.c.b16 %v1596, %v1594
    %v1631 = vpack.c.b16 %v1599, %v1597
    %v1632 = vpack.c.b16 %v1600, %v1598
    %1665 = vmatpush.bf16.msra.mxu0 %v1277
    %1666 = vmatpush.bf16.msra.mxu0 %v1273
    %1667 = vmatpush.bf16.msra.mxu0 %v1269
    %1668 = vmatpush.bf16.msra.mxu0 %v1265
    %1669 = vmatpush.bf16.msra.mxu0 %v1261
    %1670 = vmatpush.bf16.msra.mxu0 %v1257
    %1671 = vmatpush.bf16.msra.mxu0 %v1253
    %1672 = vmatpush.bf16.msra.mxu0 %v1249
    %1673 = vmatmul.bf16.gmra.mxu0 %v1601
    %v1674 = vpop.f32.mrf.mxu0
    %v1675 = vadd.f32 %v1348, %v1674
    %v1676 = vpop.f32.mrf.mxu0
    %v1677 = vadd.f32 %v1353, %v1676
    %1678 = vmatmul.bf16.gmra.mxu0 %v1603
    %v1679 = vpop.f32.mrf.mxu0
    %v1680 = vadd.f32 %v1358, %v1679
    %v1681 = vpop.f32.mrf.mxu0
    %v1682 = vadd.f32 %v1363, %v1681
    %1683 = vmatmul.bf16.gmra.mxu0 %v1605
    %v1684 = vpop.f32.mrf.mxu0
    %v1685 = vadd.f32 %v1368, %v1684
    %v1686 = vpop.f32.mrf.mxu0
    %v1687 = vadd.f32 %v1373, %v1686
    %1688 = vmatmul.bf16.gmra.mxu0 %v1607
    %v1689 = vpop.f32.mrf.mxu0
    %v1690 = vadd.f32 %v1378, %v1689
    %v1691 = vpop.f32.mrf.mxu0
    %v1692 = vadd.f32 %v1383, %v1691
    %1693 = vmatmul.bf16.gmra.mxu0 %v1609
    %v1694 = vpop.f32.mrf.mxu0
    %v1695 = vadd.f32 %v1388, %v1694
    %v1696 = vpop.f32.mrf.mxu0
    %v1697 = vadd.f32 %v1393, %v1696
    %1698 = vmatmul.bf16.gmra.mxu0 %v1611
    %v1699 = vpop.f32.mrf.mxu0
    %v1700 = vadd.f32 %v1398, %v1699
    %v1701 = vpop.f32.mrf.mxu0
    %v1702 = vadd.f32 %v1403, %v1701
    %1703 = vmatmul.bf16.gmra.mxu0 %v1613
    %v1704 = vpop.f32.mrf.mxu0
    %v1705 = vadd.f32 %v1408, %v1704
    %v1706 = vpop.f32.mrf.mxu0
    %v1707 = vadd.f32 %v1413, %v1706
    %1708 = vmatmul.bf16.gmra.mxu0 %v1615
    %v1709 = vpop.f32.mrf.mxu0
    %v1710 = vadd.f32 %v1418, %v1709
    %v1711 = vpop.f32.mrf.mxu0
    %v1712 = vadd.f32 %v1423, %v1711
    %1713 = vmatmul.bf16.gmra.mxu0 %v1617
    %v1714 = vpop.f32.mrf.mxu0
    %v1715 = vadd.f32 %v1428, %v1714
    %v1716 = vpop.f32.mrf.mxu0
    %v1717 = vadd.f32 %v1433, %v1716
    %1718 = vmatmul.bf16.gmra.mxu0 %v1619
    %v1719 = vpop.f32.mrf.mxu0
    %v1720 = vadd.f32 %v1438, %v1719
    %v1721 = vpop.f32.mrf.mxu0
    %v1722 = vadd.f32 %v1443, %v1721
    %1723 = vmatmul.bf16.gmra.mxu0 %v1621
    %v1724 = vpop.f32.mrf.mxu0
    %v1725 = vadd.f32 %v1448, %v1724
    %v1726 = vpop.f32.mrf.mxu0
    %v1727 = vadd.f32 %v1453, %v1726
    %1728 = vmatmul.bf16.gmra.mxu0 %v1623
    %v1729 = vpop.f32.mrf.mxu0
    %v1730 = vadd.f32 %v1458, %v1729
    %v1731 = vpop.f32.mrf.mxu0
    %v1732 = vadd.f32 %v1463, %v1731
    %1733 = vmatmul.bf16.gmra.mxu0 %v1625
    %v1734 = vpop.f32.mrf.mxu0
    %v1735 = vadd.f32 %v1468, %v1734
    %v1736 = vpop.f32.mrf.mxu0
    %v1737 = vadd.f32 %v1473, %v1736
    %1738 = vmatmul.bf16.gmra.mxu0 %v1627
    %v1739 = vpop.f32.mrf.mxu0
    %v1740 = vadd.f32 %v1478, %v1739
    %v1741 = vpop.f32.mrf.mxu0
    %v1742 = vadd.f32 %v1483, %v1741
    %1743 = vmatmul.bf16.gmra.mxu0 %v1629
    %v1744 = vpop.f32.mrf.mxu0
    %v1745 = vadd.f32 %v1488, %v1744
    %v1746 = vpop.f32.mrf.mxu0
    %v1747 = vadd.f32 %v1493, %v1746
    %1748 = vmatmul.bf16.gmra.mxu0 %v1631
    %v1749 = vpop.f32.mrf.mxu0
    %v1750 = vadd.f32 %v1498, %v1749
    %v1751 = vpop.f32.mrf.mxu0
    %v1752 = vadd.f32 %v1503, %v1751
    %1753 = vdwg.mxu0
    %1754 = vmatpush.bf16.msra.mxu0 %v1309
    %1755 = vmatpush.bf16.msra.mxu0 %v1305
    %1756 = vmatpush.bf16.msra.mxu0 %v1301
    %1757 = vmatpush.bf16.msra.mxu0 %v1297
    %1758 = vmatpush.bf16.msra.mxu0 %v1293
    %1759 = vmatpush.bf16.msra.mxu0 %v1289
    %1760 = vmatpush.bf16.msra.mxu0 %v1285
    %1761 = vmatpush.bf16.msra.mxu0 %v1281
    %1762 = vmatmul.bf16.gmra.mxu0 %v1602
    %v1763 = vpop.f32.mrf.mxu0
    %v1764 = vadd.f32 %v1675, %v1763
    %v1765 = vpop.f32.mrf.mxu0
    %v1766 = vadd.f32 %v1677, %v1765
    %1767 = vmatmul.bf16.gmra.mxu0 %v1604
    %v1768 = vpop.f32.mrf.mxu0
    %v1769 = vadd.f32 %v1680, %v1768
    %v1770 = vpop.f32.mrf.mxu0
    %v1771 = vadd.f32 %v1682, %v1770
    %1772 = vmatmul.bf16.gmra.mxu0 %v1606
    %v1773 = vpop.f32.mrf.mxu0
    %v1774 = vadd.f32 %v1685, %v1773
    %v1775 = vpop.f32.mrf.mxu0
    %v1776 = vadd.f32 %v1687, %v1775
    %1777 = vmatmul.bf16.gmra.mxu0 %v1608
    %v1778 = vpop.f32.mrf.mxu0
    %v1779 = vadd.f32 %v1690, %v1778
    %v1780 = vpop.f32.mrf.mxu0
    %v1781 = vadd.f32 %v1692, %v1780
    %1782 = vmatmul.bf16.gmra.mxu0 %v1610
    %v1783 = vpop.f32.mrf.mxu0
    %v1784 = vadd.f32 %v1695, %v1783
    %v1785 = vpop.f32.mrf.mxu0
    %v1786 = vadd.f32 %v1697, %v1785
    %1787 = vmatmul.bf16.gmra.mxu0 %v1612
    %v1788 = vpop.f32.mrf.mxu0
    %v1789 = vadd.f32 %v1700, %v1788
    %v1790 = vpop.f32.mrf.mxu0
    %v1791 = vadd.f32 %v1702, %v1790
    %1792 = vmatmul.bf16.gmra.mxu0 %v1614
    %v1793 = vpop.f32.mrf.mxu0
    %v1794 = vadd.f32 %v1705, %v1793
    %v1795 = vpop.f32.mrf.mxu0
    %v1796 = vadd.f32 %v1707, %v1795
    %1797 = vmatmul.bf16.gmra.mxu0 %v1616
    %v1798 = vpop.f32.mrf.mxu0
    %v1799 = vadd.f32 %v1710, %v1798
    %v1800 = vpop.f32.mrf.mxu0
    %v1801 = vadd.f32 %v1712, %v1800
    %1802 = vmatmul.bf16.gmra.mxu0 %v1618
    %v1803 = vpop.f32.mrf.mxu0
    %v1804 = vadd.f32 %v1715, %v1803
    %v1805 = vpop.f32.mrf.mxu0
    %v1806 = vadd.f32 %v1717, %v1805
    %1807 = vmatmul.bf16.gmra.mxu0 %v1620
    %v1808 = vpop.f32.mrf.mxu0
    %v1809 = vadd.f32 %v1720, %v1808
    %v1810 = vpop.f32.mrf.mxu0
    %v1811 = vadd.f32 %v1722, %v1810
    %1812 = vmatmul.bf16.gmra.mxu0 %v1622
    %v1813 = vpop.f32.mrf.mxu0
    %v1814 = vadd.f32 %v1725, %v1813
    %v1815 = vpop.f32.mrf.mxu0
    %v1816 = vadd.f32 %v1727, %v1815
    %1817 = vmatmul.bf16.gmra.mxu0 %v1624
    %v1818 = vpop.f32.mrf.mxu0
    %v1819 = vadd.f32 %v1730, %v1818
    %v1820 = vpop.f32.mrf.mxu0
    %v1821 = vadd.f32 %v1732, %v1820
    %1822 = vmatmul.bf16.gmra.mxu0 %v1626
    %v1823 = vpop.f32.mrf.mxu0
    %v1824 = vadd.f32 %v1735, %v1823
    %v1825 = vpop.f32.mrf.mxu0
    %v1826 = vadd.f32 %v1737, %v1825
    %1827 = vmatmul.bf16.gmra.mxu0 %v1628
    %v1828 = vpop.f32.mrf.mxu0
    %v1829 = vadd.f32 %v1740, %v1828
    %v1830 = vpop.f32.mrf.mxu0
    %v1831 = vadd.f32 %v1742, %v1830
    %1832 = vmatmul.bf16.gmra.mxu0 %v1630
    %v1833 = vpop.f32.mrf.mxu0
    %v1834 = vadd.f32 %v1745, %v1833
    %v1835 = vpop.f32.mrf.mxu0
    %v1836 = vadd.f32 %v1747, %v1835
    %1837 = vmatmul.bf16.gmra.mxu0 %v1632
    %v1838 = vpop.f32.mrf.mxu0
    %v1839 = vadd.f32 %v1750, %v1838
    %v1840 = vpop.f32.mrf.mxu0
    %v1841 = vadd.f32 %v1752, %v1840
    %1842 = vdwg.mxu0
    %1843 = vmatpush.bf16.msra.mxu0 %v1278
    %1844 = vmatpush.bf16.msra.mxu0 %v1274
    %1845 = vmatpush.bf16.msra.mxu0 %v1270
    %1846 = vmatpush.bf16.msra.mxu0 %v1266
    %1847 = vmatpush.bf16.msra.mxu0 %v1262
    %1848 = vmatpush.bf16.msra.mxu0 %v1258
    %1849 = vmatpush.bf16.msra.mxu0 %v1254
    %1850 = vmatpush.bf16.msra.mxu0 %v1250
    %1851 = vmatmul.bf16.gmra.mxu0 %v1601
    %v1852 = vpop.f32.mrf.mxu0
    %v1853 = vadd.f32 %v1348, %v1852
    %v1854 = vpop.f32.mrf.mxu0
    %v1855 = vadd.f32 %v1353, %v1854
    %1856 = vmatmul.bf16.gmra.mxu0 %v1603
    %v1857 = vpop.f32.mrf.mxu0
    %v1858 = vadd.f32 %v1358, %v1857
    %v1859 = vpop.f32.mrf.mxu0
    %v1860 = vadd.f32 %v1363, %v1859
    %1861 = vmatmul.bf16.gmra.mxu0 %v1605
    %v1862 = vpop.f32.mrf.mxu0
    %v1863 = vadd.f32 %v1368, %v1862
    %v1864 = vpop.f32.mrf.mxu0
    %v1865 = vadd.f32 %v1373, %v1864
    %1866 = vmatmul.bf16.gmra.mxu0 %v1607
    %v1867 = vpop.f32.mrf.mxu0
    %v1868 = vadd.f32 %v1378, %v1867
    %v1869 = vpop.f32.mrf.mxu0
    %v1870 = vadd.f32 %v1383, %v1869
    %1871 = vmatmul.bf16.gmra.mxu0 %v1609
    %v1872 = vpop.f32.mrf.mxu0
    %v1873 = vadd.f32 %v1388, %v1872
    %v1874 = vpop.f32.mrf.mxu0
    %v1875 = vadd.f32 %v1393, %v1874
    %1876 = vmatmul.bf16.gmra.mxu0 %v1611
    %v1877 = vpop.f32.mrf.mxu0
    %v1878 = vadd.f32 %v1398, %v1877
    %v1879 = vpop.f32.mrf.mxu0
    %v1880 = vadd.f32 %v1403, %v1879
    %1881 = vmatmul.bf16.gmra.mxu0 %v1613
    %v1882 = vpop.f32.mrf.mxu0
    %v1883 = vadd.f32 %v1408, %v1882
    %v1884 = vpop.f32.mrf.mxu0
    %v1885 = vadd.f32 %v1413, %v1884
    %1886 = vmatmul.bf16.gmra.mxu0 %v1615
    %v1887 = vpop.f32.mrf.mxu0
    %v1888 = vadd.f32 %v1418, %v1887
    %v1889 = vpop.f32.mrf.mxu0
    %v1890 = vadd.f32 %v1423, %v1889
    %1891 = vmatmul.bf16.gmra.mxu0 %v1617
    %v1892 = vpop.f32.mrf.mxu0
    %v1893 = vadd.f32 %v1428, %v1892
    %v1894 = vpop.f32.mrf.mxu0
    %v1895 = vadd.f32 %v1433, %v1894
    %1896 = vmatmul.bf16.gmra.mxu0 %v1619
    %v1897 = vpop.f32.mrf.mxu0
    %v1898 = vadd.f32 %v1438, %v1897
    %v1899 = vpop.f32.mrf.mxu0
    %v1900 = vadd.f32 %v1443, %v1899
    %1901 = vmatmul.bf16.gmra.mxu0 %v1621
    %v1902 = vpop.f32.mrf.mxu0
    %v1903 = vadd.f32 %v1448, %v1902
    %v1904 = vpop.f32.mrf.mxu0
    %v1905 = vadd.f32 %v1453, %v1904
    %1906 = vmatmul.bf16.gmra.mxu0 %v1623
    %v1907 = vpop.f32.mrf.mxu0
    %v1908 = vadd.f32 %v1458, %v1907
    %v1909 = vpop.f32.mrf.mxu0
    %v1910 = vadd.f32 %v1463, %v1909
    %1911 = vmatmul.bf16.gmra.mxu0 %v1625
    %v1912 = vpop.f32.mrf.mxu0
    %v1913 = vadd.f32 %v1468, %v1912
    %v1914 = vpop.f32.mrf.mxu0
    %v1915 = vadd.f32 %v1473, %v1914
    %1916 = vmatmul.bf16.gmra.mxu0 %v1627
    %v1917 = vpop.f32.mrf.mxu0
    %v1918 = vadd.f32 %v1478, %v1917
    %v1919 = vpop.f32.mrf.mxu0
    %v1920 = vadd.f32 %v1483, %v1919
    %1921 = vmatmul.bf16.gmra.mxu0 %v1629
    %v1922 = vpop.f32.mrf.mxu0
    %v1923 = vadd.f32 %v1488, %v1922
    %v1924 = vpop.f32.mrf.mxu0
    %v1925 = vadd.f32 %v1493, %v1924
    %1926 = vmatmul.bf16.gmra.mxu0 %v1631
    %v1927 = vpop.f32.mrf.mxu0
    %v1928 = vadd.f32 %v1498, %v1927
    %v1929 = vpop.f32.mrf.mxu0
    %v1930 = vadd.f32 %v1503, %v1929
    %1931 = vdwg.mxu0
    %1932 = vmatpush.bf16.msra.mxu0 %v1310
    %1933 = vmatpush.bf16.msra.mxu0 %v1306
    %1934 = vmatpush.bf16.msra.mxu0 %v1302
    %1935 = vmatpush.bf16.msra.mxu0 %v1298
    %1936 = vmatpush.bf16.msra.mxu0 %v1294
    %1937 = vmatpush.bf16.msra.mxu0 %v1290
    %1938 = vmatpush.bf16.msra.mxu0 %v1286
    %1939 = vmatpush.bf16.msra.mxu0 %v1282
    %1940 = vmatmul.bf16.gmra.mxu0 %v1602
    %v1941 = vpop.f32.mrf.mxu0
    %v1942 = vadd.f32 %v1853, %v1941
    %v1943 = vpop.f32.mrf.mxu0
    %v1944 = vadd.f32 %v1855, %v1943
    %1945 = vmatmul.bf16.gmra.mxu0 %v1604
    %v1946 = vpop.f32.mrf.mxu0
    %v1947 = vadd.f32 %v1858, %v1946
    %v1948 = vpop.f32.mrf.mxu0
    %v1949 = vadd.f32 %v1860, %v1948
    %1950 = vmatmul.bf16.gmra.mxu0 %v1606
    %v1951 = vpop.f32.mrf.mxu0
    %v1952 = vadd.f32 %v1863, %v1951
    %v1953 = vpop.f32.mrf.mxu0
    %v1954 = vadd.f32 %v1865, %v1953
    %1955 = vmatmul.bf16.gmra.mxu0 %v1608
    %v1956 = vpop.f32.mrf.mxu0
    %v1957 = vadd.f32 %v1868, %v1956
    %v1958 = vpop.f32.mrf.mxu0
    %v1959 = vadd.f32 %v1870, %v1958
    %1960 = vmatmul.bf16.gmra.mxu0 %v1610
    %v1961 = vpop.f32.mrf.mxu0
    %v1962 = vadd.f32 %v1873, %v1961
    %v1963 = vpop.f32.mrf.mxu0
    %v1964 = vadd.f32 %v1875, %v1963
    %1965 = vmatmul.bf16.gmra.mxu0 %v1612
    %v1966 = vpop.f32.mrf.mxu0
    %v1967 = vadd.f32 %v1878, %v1966
    %v1968 = vpop.f32.mrf.mxu0
    %v1969 = vadd.f32 %v1880, %v1968
    %1970 = vmatmul.bf16.gmra.mxu0 %v1614
    %v1971 = vpop.f32.mrf.mxu0
    %v1972 = vadd.f32 %v1883, %v1971
    %v1973 = vpop.f32.mrf.mxu0
    %v1974 = vadd.f32 %v1885, %v1973
    %1975 = vmatmul.bf16.gmra.mxu0 %v1616
    %v1976 = vpop.f32.mrf.mxu0
    %v1977 = vadd.f32 %v1888, %v1976
    %v1978 = vpop.f32.mrf.mxu0
    %v1979 = vadd.f32 %v1890, %v1978
    %1980 = vmatmul.bf16.gmra.mxu0 %v1618
    %v1981 = vpop.f32.mrf.mxu0
    %v1982 = vadd.f32 %v1893, %v1981
    %v1983 = vpop.f32.mrf.mxu0
    %v1984 = vadd.f32 %v1895, %v1983
    %1985 = vmatmul.bf16.gmra.mxu0 %v1620
    %v1986 = vpop.f32.mrf.mxu0
    %v1987 = vadd.f32 %v1898, %v1986
    %v1988 = vpop.f32.mrf.mxu0
    %v1989 = vadd.f32 %v1900, %v1988
    %1990 = vmatmul.bf16.gmra.mxu0 %v1622
    %v1991 = vpop.f32.mrf.mxu0
    %v1992 = vadd.f32 %v1903, %v1991
    %v1993 = vpop.f32.mrf.mxu0
    %v1994 = vadd.f32 %v1905, %v1993
    %1995 = vmatmul.bf16.gmra.mxu0 %v1624
    %v1996 = vpop.f32.mrf.mxu0
    %v1997 = vadd.f32 %v1908, %v1996
    %v1998 = vpop.f32.mrf.mxu0
    %v1999 = vadd.f32 %v1910, %v1998
    %2000 = vmatmul.bf16.gmra.mxu0 %v1626
    %v2001 = vpop.f32.mrf.mxu0
    %v2002 = vadd.f32 %v1913, %v2001
    %v2003 = vpop.f32.mrf.mxu0
    %v2004 = vadd.f32 %v1915, %v2003
    %2005 = vmatmul.bf16.gmra.mxu0 %v1628
    %v2006 = vpop.f32.mrf.mxu0
    %v2007 = vadd.f32 %v1918, %v2006
    %v2008 = vpop.f32.mrf.mxu0
    %v2009 = vadd.f32 %v1920, %v2008
    %2010 = vmatmul.bf16.gmra.mxu0 %v1630
    %v2011 = vpop.f32.mrf.mxu0
    %v2012 = vadd.f32 %v1923, %v2011
    %v2013 = vpop.f32.mrf.mxu0
    %v2014 = vadd.f32 %v1925, %v2013
    %2015 = vmatmul.bf16.gmra.mxu0 %v1632
    %v2016 = vpop.f32.mrf.mxu0
    %v2017 = vadd.f32 %v1928, %v2016
    %v2018 = vpop.f32.mrf.mxu0
    %v2019 = vadd.f32 %v1930, %v2018
    %2020 = vdwg.mxu0
    %2021 = vmatpush.bf16.msra.mxu0 %v1279
    %2022 = vmatpush.bf16.msra.mxu0 %v1275
    %2023 = vmatpush.bf16.msra.mxu0 %v1271
    %2024 = vmatpush.bf16.msra.mxu0 %v1267
    %2025 = vmatpush.bf16.msra.mxu0 %v1263
    %2026 = vmatpush.bf16.msra.mxu0 %v1259
    %2027 = vmatpush.bf16.msra.mxu0 %v1255
    %2028 = vmatpush.bf16.msra.mxu0 %v1251
    %2029 = vmatmul.bf16.gmra.mxu0 %v1601
    %v2030 = vpop.f32.mrf.mxu0
    %v2031 = vadd.f32 %v1348, %v2030
    %v2032 = vpop.f32.mrf.mxu0
    %v2033 = vadd.f32 %v1353, %v2032
    %2034 = vmatmul.bf16.gmra.mxu0 %v1603
    %v2035 = vpop.f32.mrf.mxu0
    %v2036 = vadd.f32 %v1358, %v2035
    %v2037 = vpop.f32.mrf.mxu0
    %v2038 = vadd.f32 %v1363, %v2037
    %2039 = vmatmul.bf16.gmra.mxu0 %v1605
    %v2040 = vpop.f32.mrf.mxu0
    %v2041 = vadd.f32 %v1368, %v2040
    %v2042 = vpop.f32.mrf.mxu0
    %v2043 = vadd.f32 %v1373, %v2042
    %2044 = vmatmul.bf16.gmra.mxu0 %v1607
    %v2045 = vpop.f32.mrf.mxu0
    %v2046 = vadd.f32 %v1378, %v2045
    %v2047 = vpop.f32.mrf.mxu0
    %v2048 = vadd.f32 %v1383, %v2047
    %2049 = vmatmul.bf16.gmra.mxu0 %v1609
    %v2050 = vpop.f32.mrf.mxu0
    %v2051 = vadd.f32 %v1388, %v2050
    %v2052 = vpop.f32.mrf.mxu0
    %v2053 = vadd.f32 %v1393, %v2052
    %2054 = vmatmul.bf16.gmra.mxu0 %v1611
    %v2055 = vpop.f32.mrf.mxu0
    %v2056 = vadd.f32 %v1398, %v2055
    %v2057 = vpop.f32.mrf.mxu0
    %v2058 = vadd.f32 %v1403, %v2057
    %2059 = vmatmul.bf16.gmra.mxu0 %v1613
    %v2060 = vpop.f32.mrf.mxu0
    %v2061 = vadd.f32 %v1408, %v2060
    %v2062 = vpop.f32.mrf.mxu0
    %v2063 = vadd.f32 %v1413, %v2062
    %2064 = vmatmul.bf16.gmra.mxu0 %v1615
    %v2065 = vpop.f32.mrf.mxu0
    %v2066 = vadd.f32 %v1418, %v2065
    %v2067 = vpop.f32.mrf.mxu0
    %v2068 = vadd.f32 %v1423, %v2067
    %2069 = vmatmul.bf16.gmra.mxu0 %v1617
    %v2070 = vpop.f32.mrf.mxu0
    %v2071 = vadd.f32 %v1428, %v2070
    %v2072 = vpop.f32.mrf.mxu0
    %v2073 = vadd.f32 %v1433, %v2072
    %2074 = vmatmul.bf16.gmra.mxu0 %v1619
    %v2075 = vpop.f32.mrf.mxu0
    %v2076 = vadd.f32 %v1438, %v2075
    %v2077 = vpop.f32.mrf.mxu0
    %v2078 = vadd.f32 %v1443, %v2077
    %2079 = vmatmul.bf16.gmra.mxu0 %v1621
    %v2080 = vpop.f32.mrf.mxu0
    %v2081 = vadd.f32 %v1448, %v2080
    %v2082 = vpop.f32.mrf.mxu0
    %v2083 = vadd.f32 %v1453, %v2082
    %2084 = vmatmul.bf16.gmra.mxu0 %v1623
    %v2085 = vpop.f32.mrf.mxu0
    %v2086 = vadd.f32 %v1458, %v2085
    %v2087 = vpop.f32.mrf.mxu0
    %v2088 = vadd.f32 %v1463, %v2087
    %2089 = vmatmul.bf16.gmra.mxu0 %v1625
    %v2090 = vpop.f32.mrf.mxu0
    %v2091 = vadd.f32 %v1468, %v2090
    %v2092 = vpop.f32.mrf.mxu0
    %v2093 = vadd.f32 %v1473, %v2092
    %2094 = vmatmul.bf16.gmra.mxu0 %v1627
    %v2095 = vpop.f32.mrf.mxu0
    %v2096 = vadd.f32 %v1478, %v2095
    %v2097 = vpop.f32.mrf.mxu0
    %v2098 = vadd.f32 %v1483, %v2097
    %2099 = vmatmul.bf16.gmra.mxu0 %v1629
    %v2100 = vpop.f32.mrf.mxu0
    %v2101 = vadd.f32 %v1488, %v2100
    %v2102 = vpop.f32.mrf.mxu0
    %v2103 = vadd.f32 %v1493, %v2102
    %2104 = vmatmul.bf16.gmra.mxu0 %v1631
    %v2105 = vpop.f32.mrf.mxu0
    %v2106 = vadd.f32 %v1498, %v2105
    %v2107 = vpop.f32.mrf.mxu0
    %v2108 = vadd.f32 %v1503, %v2107
    %2109 = vdwg.mxu0
    %2110 = vmatpush.bf16.msra.mxu0 %v1311
    %2111 = vmatpush.bf16.msra.mxu0 %v1307
    %2112 = vmatpush.bf16.msra.mxu0 %v1303
    %2113 = vmatpush.bf16.msra.mxu0 %v1299
    %2114 = vmatpush.bf16.msra.mxu0 %v1295
    %2115 = vmatpush.bf16.msra.mxu0 %v1291
    %2116 = vmatpush.bf16.msra.mxu0 %v1287
    %2117 = vmatpush.bf16.msra.mxu0 %v1283
    %2118 = vmatmul.bf16.gmra.mxu0 %v1602
    %v2119 = vpop.f32.mrf.mxu0
    %v2120 = vadd.f32 %v2031, %v2119
    %v2121 = vpop.f32.mrf.mxu0
    %v2122 = vadd.f32 %v2033, %v2121
    %2123 = vmatmul.bf16.gmra.mxu0 %v1604
    %v2124 = vpop.f32.mrf.mxu0
    %v2125 = vadd.f32 %v2036, %v2124
    %v2126 = vpop.f32.mrf.mxu0
    %v2127 = vadd.f32 %v2038, %v2126
    %2128 = vmatmul.bf16.gmra.mxu0 %v1606
    %v2129 = vpop.f32.mrf.mxu0
    %v2130 = vadd.f32 %v2041, %v2129
    %v2131 = vpop.f32.mrf.mxu0
    %v2132 = vadd.f32 %v2043, %v2131
    %2133 = vmatmul.bf16.gmra.mxu0 %v1608
    %v2134 = vpop.f32.mrf.mxu0
    %v2135 = vadd.f32 %v2046, %v2134
    %v2136 = vpop.f32.mrf.mxu0
    %v2137 = vadd.f32 %v2048, %v2136
    %2138 = vmatmul.bf16.gmra.mxu0 %v1610
    %v2139 = vpop.f32.mrf.mxu0
    %v2140 = vadd.f32 %v2051, %v2139
    %v2141 = vpop.f32.mrf.mxu0
    %v2142 = vadd.f32 %v2053, %v2141
    %2143 = vmatmul.bf16.gmra.mxu0 %v1612
    %v2144 = vpop.f32.mrf.mxu0
    %v2145 = vadd.f32 %v2056, %v2144
    %v2146 = vpop.f32.mrf.mxu0
    %v2147 = vadd.f32 %v2058, %v2146
    %2148 = vmatmul.bf16.gmra.mxu0 %v1614
    %v2149 = vpop.f32.mrf.mxu0
    %v2150 = vadd.f32 %v2061, %v2149
    %v2151 = vpop.f32.mrf.mxu0
    %v2152 = vadd.f32 %v2063, %v2151
    %2153 = vmatmul.bf16.gmra.mxu0 %v1616
    %v2154 = vpop.f32.mrf.mxu0
    %v2155 = vadd.f32 %v2066, %v2154
    %v2156 = vpop.f32.mrf.mxu0
    %v2157 = vadd.f32 %v2068, %v2156
    %2158 = vmatmul.bf16.gmra.mxu0 %v1618
    %v2159 = vpop.f32.mrf.mxu0
    %v2160 = vadd.f32 %v2071, %v2159
    %v2161 = vpop.f32.mrf.mxu0
    %v2162 = vadd.f32 %v2073, %v2161
    %2163 = vmatmul.bf16.gmra.mxu0 %v1620
    %v2164 = vpop.f32.mrf.mxu0
    %v2165 = vadd.f32 %v2076, %v2164
    %v2166 = vpop.f32.mrf.mxu0
    %v2167 = vadd.f32 %v2078, %v2166
    %2168 = vmatmul.bf16.gmra.mxu0 %v1622
    %v2169 = vpop.f32.mrf.mxu0
    %v2170 = vadd.f32 %v2081, %v2169
    %v2171 = vpop.f32.mrf.mxu0
    %v2172 = vadd.f32 %v2083, %v2171
    %2173 = vmatmul.bf16.gmra.mxu0 %v1624
    %v2174 = vpop.f32.mrf.mxu0
    %v2175 = vadd.f32 %v2086, %v2174
    %v2176 = vpop.f32.mrf.mxu0
    %v2177 = vadd.f32 %v2088, %v2176
    %2178 = vmatmul.bf16.gmra.mxu0 %v1626
    %v2179 = vpop.f32.mrf.mxu0
    %v2180 = vadd.f32 %v2091, %v2179
    %v2181 = vpop.f32.mrf.mxu0
    %v2182 = vadd.f32 %v2093, %v2181
    %2183 = vmatmul.bf16.gmra.mxu0 %v1628
    %v2184 = vpop.f32.mrf.mxu0
    %v2185 = vadd.f32 %v2096, %v2184
    %v2186 = vpop.f32.mrf.mxu0
    %v2187 = vadd.f32 %v2098, %v2186
    %2188 = vmatmul.bf16.gmra.mxu0 %v1630
    %v2189 = vpop.f32.mrf.mxu0
    %v2190 = vadd.f32 %v2101, %v2189
    %v2191 = vpop.f32.mrf.mxu0
    %v2192 = vadd.f32 %v2103, %v2191
    %2193 = vmatmul.bf16.gmra.mxu0 %v1632
    %v2194 = vpop.f32.mrf.mxu0
    %v2195 = vadd.f32 %v2106, %v2194
    %v2196 = vpop.f32.mrf.mxu0
    %v2197 = vadd.f32 %v2108, %v2196
    %2198 = vdwg.mxu0
    %2199 = vmatpush.bf16.msra.mxu0 %v1280
    %2200 = vmatpush.bf16.msra.mxu0 %v1276
    %2201 = vmatpush.bf16.msra.mxu0 %v1272
    %2202 = vmatpush.bf16.msra.mxu0 %v1268
    %2203 = vmatpush.bf16.msra.mxu0 %v1264
    %2204 = vmatpush.bf16.msra.mxu0 %v1260
    %2205 = vmatpush.bf16.msra.mxu0 %v1256
    %2206 = vmatpush.bf16.msra.mxu0 %v1252
    %2207 = vmatmul.bf16.gmra.mxu0 %v1601
    %v2208 = vpop.f32.mrf.mxu0
    %v2209 = vadd.f32 %v1348, %v2208
    %v2210 = vpop.f32.mrf.mxu0
    %v2211 = vadd.f32 %v1353, %v2210
    %2212 = vmatmul.bf16.gmra.mxu0 %v1603
    %v2213 = vpop.f32.mrf.mxu0
    %v2214 = vadd.f32 %v1358, %v2213
    %v2215 = vpop.f32.mrf.mxu0
    %v2216 = vadd.f32 %v1363, %v2215
    %2217 = vmatmul.bf16.gmra.mxu0 %v1605
    %v2218 = vpop.f32.mrf.mxu0
    %v2219 = vadd.f32 %v1368, %v2218
    %v2220 = vpop.f32.mrf.mxu0
    %v2221 = vadd.f32 %v1373, %v2220
    %2222 = vmatmul.bf16.gmra.mxu0 %v1607
    %v2223 = vpop.f32.mrf.mxu0
    %v2224 = vadd.f32 %v1378, %v2223
    %v2225 = vpop.f32.mrf.mxu0
    %v2226 = vadd.f32 %v1383, %v2225
    %2227 = vmatmul.bf16.gmra.mxu0 %v1609
    %v2228 = vpop.f32.mrf.mxu0
    %v2229 = vadd.f32 %v1388, %v2228
    %v2230 = vpop.f32.mrf.mxu0
    %v2231 = vadd.f32 %v1393, %v2230
    %2232 = vmatmul.bf16.gmra.mxu0 %v1611
    %v2233 = vpop.f32.mrf.mxu0
    %v2234 = vadd.f32 %v1398, %v2233
    %v2235 = vpop.f32.mrf.mxu0
    %v2236 = vadd.f32 %v1403, %v2235
    %2237 = vmatmul.bf16.gmra.mxu0 %v1613
    %v2238 = vpop.f32.mrf.mxu0
    %v2239 = vadd.f32 %v1408, %v2238
    %v2240 = vpop.f32.mrf.mxu0
    %v2241 = vadd.f32 %v1413, %v2240
    %2242 = vmatmul.bf16.gmra.mxu0 %v1615
    %v2243 = vpop.f32.mrf.mxu0
    %v2244 = vadd.f32 %v1418, %v2243
    %v2245 = vpop.f32.mrf.mxu0
    %v2246 = vadd.f32 %v1423, %v2245
    %2247 = vmatmul.bf16.gmra.mxu0 %v1617
    %v2248 = vpop.f32.mrf.mxu0
    %v2249 = vadd.f32 %v1428, %v2248
    %v2250 = vpop.f32.mrf.mxu0
    %v2251 = vadd.f32 %v1433, %v2250
    %2252 = vmatmul.bf16.gmra.mxu0 %v1619
    %v2253 = vpop.f32.mrf.mxu0
    %v2254 = vadd.f32 %v1438, %v2253
    %v2255 = vpop.f32.mrf.mxu0
    %v2256 = vadd.f32 %v1443, %v2255
    %2257 = vmatmul.bf16.gmra.mxu0 %v1621
    %v2258 = vpop.f32.mrf.mxu0
    %v2259 = vadd.f32 %v1448, %v2258
    %v2260 = vpop.f32.mrf.mxu0
    %v2261 = vadd.f32 %v1453, %v2260
    %2262 = vmatmul.bf16.gmra.mxu0 %v1623
    %v2263 = vpop.f32.mrf.mxu0
    %v2264 = vadd.f32 %v1458, %v2263
    %v2265 = vpop.f32.mrf.mxu0
    %v2266 = vadd.f32 %v1463, %v2265
    %2267 = vmatmul.bf16.gmra.mxu0 %v1625
    %v2268 = vpop.f32.mrf.mxu0
    %v2269 = vadd.f32 %v1468, %v2268
    %v2270 = vpop.f32.mrf.mxu0
    %v2271 = vadd.f32 %v1473, %v2270
    %2272 = vmatmul.bf16.gmra.mxu0 %v1627
    %v2273 = vpop.f32.mrf.mxu0
    %v2274 = vadd.f32 %v1478, %v2273
    %v2275 = vpop.f32.mrf.mxu0
    %v2276 = vadd.f32 %v1483, %v2275
    %2277 = vmatmul.bf16.gmra.mxu0 %v1629
    %v2278 = vpop.f32.mrf.mxu0
    %v2279 = vadd.f32 %v1488, %v2278
    %v2280 = vpop.f32.mrf.mxu0
    %v2281 = vadd.f32 %v1493, %v2280
    %2282 = vmatmul.bf16.gmra.mxu0 %v1631
    %v2283 = vpop.f32.mrf.mxu0
    %v2284 = vadd.f32 %v1498, %v2283
    %v2285 = vpop.f32.mrf.mxu0
    %v2286 = vadd.f32 %v1503, %v2285
    %2287 = vdwg.mxu0
    %2288 = vmatpush.bf16.msra.mxu0 %v1312
    %2289 = vmatpush.bf16.msra.mxu0 %v1308
    %2290 = vmatpush.bf16.msra.mxu0 %v1304
    %2291 = vmatpush.bf16.msra.mxu0 %v1300
    %2292 = vmatpush.bf16.msra.mxu0 %v1296
    %2293 = vmatpush.bf16.msra.mxu0 %v1292
    %2294 = vmatpush.bf16.msra.mxu0 %v1288
    %2295 = vmatpush.bf16.msra.mxu0 %v1284
    %2296 = vmatmul.bf16.gmra.mxu0 %v1602
    %v2297 = vpop.f32.mrf.mxu0
    %v2298 = vadd.f32 %v2209, %v2297
    %v2299 = vpop.f32.mrf.mxu0
    %v2300 = vadd.f32 %v2211, %v2299
    %2301 = vmatmul.bf16.gmra.mxu0 %v1604
    %v2302 = vpop.f32.mrf.mxu0
    %v2303 = vadd.f32 %v2214, %v2302
    %v2304 = vpop.f32.mrf.mxu0
    %v2305 = vadd.f32 %v2216, %v2304
    %2306 = vmatmul.bf16.gmra.mxu0 %v1606
    %v2307 = vpop.f32.mrf.mxu0
    %v2308 = vadd.f32 %v2219, %v2307
    %v2309 = vpop.f32.mrf.mxu0
    %v2310 = vadd.f32 %v2221, %v2309
    %2311 = vmatmul.bf16.gmra.mxu0 %v1608
    %v2312 = vpop.f32.mrf.mxu0
    %v2313 = vadd.f32 %v2224, %v2312
    %v2314 = vpop.f32.mrf.mxu0
    %v2315 = vadd.f32 %v2226, %v2314
    %2316 = vmatmul.bf16.gmra.mxu0 %v1610
    %v2317 = vpop.f32.mrf.mxu0
    %v2318 = vadd.f32 %v2229, %v2317
    %v2319 = vpop.f32.mrf.mxu0
    %v2320 = vadd.f32 %v2231, %v2319
    %2321 = vmatmul.bf16.gmra.mxu0 %v1612
    %v2322 = vpop.f32.mrf.mxu0
    %v2323 = vadd.f32 %v2234, %v2322
    %v2324 = vpop.f32.mrf.mxu0
    %v2325 = vadd.f32 %v2236, %v2324
    %2326 = vmatmul.bf16.gmra.mxu0 %v1614
    %v2327 = vpop.f32.mrf.mxu0
    %v2328 = vadd.f32 %v2239, %v2327
    %v2329 = vpop.f32.mrf.mxu0
    %v2330 = vadd.f32 %v2241, %v2329
    %2331 = vmatmul.bf16.gmra.mxu0 %v1616
    %v2332 = vpop.f32.mrf.mxu0
    %v2333 = vadd.f32 %v2244, %v2332
    %v2334 = vpop.f32.mrf.mxu0
    %v2335 = vadd.f32 %v2246, %v2334
    %2336 = vmatmul.bf16.gmra.mxu0 %v1618
    %v2337 = vpop.f32.mrf.mxu0
    %v2338 = vadd.f32 %v2249, %v2337
    %v2339 = vpop.f32.mrf.mxu0
    %v2340 = vadd.f32 %v2251, %v2339
    %2341 = vmatmul.bf16.gmra.mxu0 %v1620
    %v2342 = vpop.f32.mrf.mxu0
    %v2343 = vadd.f32 %v2254, %v2342
    %v2344 = vpop.f32.mrf.mxu0
    %v2345 = vadd.f32 %v2256, %v2344
    %2346 = vmatmul.bf16.gmra.mxu0 %v1622
    %v2347 = vpop.f32.mrf.mxu0
    %v2348 = vadd.f32 %v2259, %v2347
    %v2349 = vpop.f32.mrf.mxu0
    %v2350 = vadd.f32 %v2261, %v2349
    %2351 = vmatmul.bf16.gmra.mxu0 %v1624
    %v2352 = vpop.f32.mrf.mxu0
    %v2353 = vadd.f32 %v2264, %v2352
    %v2354 = vpop.f32.mrf.mxu0
    %v2355 = vadd.f32 %v2266, %v2354
    %2356 = vmatmul.bf16.gmra.mxu0 %v1626
    %v2357 = vpop.f32.mrf.mxu0
    %v2358 = vadd.f32 %v2269, %v2357
    %v2359 = vpop.f32.mrf.mxu0
    %v2360 = vadd.f32 %v2271, %v2359
    %2361 = vmatmul.bf16.gmra.mxu0 %v1628
    %v2362 = vpop.f32.mrf.mxu0
    %v2363 = vadd.f32 %v2274, %v2362
    %v2364 = vpop.f32.mrf.mxu0
    %v2365 = vadd.f32 %v2276, %v2364
    %2366 = vmatmul.bf16.gmra.mxu0 %v1630
    %v2367 = vpop.f32.mrf.mxu0
    %v2368 = vadd.f32 %v2279, %v2367
    %v2369 = vpop.f32.mrf.mxu0
    %v2370 = vadd.f32 %v2281, %v2369
    %2371 = vmatmul.bf16.gmra.mxu0 %v1632
    %v2372 = vpop.f32.mrf.mxu0
    %v2373 = vadd.f32 %v2284, %v2372
    %v2374 = vpop.f32.mrf.mxu0
    %v2375 = vadd.f32 %v2286, %v2374
    %2376 = vdwg.mxu0
    %vm2377 = vcmp.gt.f32.partialorder %v1764, 0.0
    %vm2378 = vcmp.gt.f32.partialorder %v1942, 0.0
    %vm2379 = vcmp.gt.f32.partialorder %v2120, 0.0
    %vm2380 = vcmp.gt.f32.partialorder %v2298, 0.0
    %vm2381 = vcmp.gt.f32.partialorder %v1766, 0.0
    %vm2382 = vcmp.gt.f32.partialorder %v1944, 0.0
    %vm2383 = vcmp.gt.f32.partialorder %v2122, 0.0
    %vm2384 = vcmp.gt.f32.partialorder %v2300, 0.0
    %vm2385 = vcmp.gt.f32.partialorder %v1769, 0.0
    %vm2386 = vcmp.gt.f32.partialorder %v1947, 0.0
    %vm2387 = vcmp.gt.f32.partialorder %v2125, 0.0
    %vm2388 = vcmp.gt.f32.partialorder %v2303, 0.0
    %vm2389 = vcmp.gt.f32.partialorder %v1771, 0.0
    %vm2390 = vcmp.gt.f32.partialorder %v1949, 0.0
    %vm2391 = vcmp.gt.f32.partialorder %v2127, 0.0
    %vm2392 = vcmp.gt.f32.partialorder %v2305, 0.0
    %vm2393 = vcmp.gt.f32.partialorder %v1774, 0.0
    %vm2394 = vcmp.gt.f32.partialorder %v1952, 0.0
    %vm2395 = vcmp.gt.f32.partialorder %v2130, 0.0
    %vm2396 = vcmp.gt.f32.partialorder %v2308, 0.0
    %vm2397 = vcmp.gt.f32.partialorder %v1776, 0.0
    %vm2398 = vcmp.gt.f32.partialorder %v1954, 0.0
    %vm2399 = vcmp.gt.f32.partialorder %v2132, 0.0
    %vm2400 = vcmp.gt.f32.partialorder %v2310, 0.0
    %vm2401 = vcmp.gt.f32.partialorder %v1779, 0.0
    %vm2402 = vcmp.gt.f32.partialorder %v1957, 0.0
    %vm2403 = vcmp.gt.f32.partialorder %v2135, 0.0
    %vm2404 = vcmp.gt.f32.partialorder %v2313, 0.0
    %vm2405 = vcmp.gt.f32.partialorder %v1781, 0.0
    %vm2406 = vcmp.gt.f32.partialorder %v1959, 0.0
    %vm2407 = vcmp.gt.f32.partialorder %v2137, 0.0
    %vm2408 = vcmp.gt.f32.partialorder %v2315, 0.0
    %vm2409 = vcmp.gt.f32.partialorder %v1784, 0.0
    %vm2410 = vcmp.gt.f32.partialorder %v1962, 0.0
    %vm2411 = vcmp.gt.f32.partialorder %v2140, 0.0
    %vm2412 = vcmp.gt.f32.partialorder %v2318, 0.0
    %vm2413 = vcmp.gt.f32.partialorder %v1786, 0.0
    %vm2414 = vcmp.gt.f32.partialorder %v1964, 0.0
    %vm2415 = vcmp.gt.f32.partialorder %v2142, 0.0
    %vm2416 = vcmp.gt.f32.partialorder %v2320, 0.0
    %vm2417 = vcmp.gt.f32.partialorder %v1789, 0.0
    %vm2418 = vcmp.gt.f32.partialorder %v1967, 0.0
    %vm2419 = vcmp.gt.f32.partialorder %v2145, 0.0
    %vm2420 = vcmp.gt.f32.partialorder %v2323, 0.0
    %vm2421 = vcmp.gt.f32.partialorder %v1791, 0.0
    %vm2422 = vcmp.gt.f32.partialorder %v1969, 0.0
    %vm2423 = vcmp.gt.f32.partialorder %v2147, 0.0
    %vm2424 = vcmp.gt.f32.partialorder %v2325, 0.0
    %vm2425 = vcmp.gt.f32.partialorder %v1794, 0.0
    %vm2426 = vcmp.gt.f32.partialorder %v1972, 0.0
    %vm2427 = vcmp.gt.f32.partialorder %v2150, 0.0
    %vm2428 = vcmp.gt.f32.partialorder %v2328, 0.0
    %vm2429 = vcmp.gt.f32.partialorder %v1796, 0.0
    %vm2430 = vcmp.gt.f32.partialorder %v1974, 0.0
    %vm2431 = vcmp.gt.f32.partialorder %v2152, 0.0
    %vm2432 = vcmp.gt.f32.partialorder %v2330, 0.0
    %vm2433 = vcmp.gt.f32.partialorder %v1799, 0.0
    %vm2434 = vcmp.gt.f32.partialorder %v1977, 0.0
    %vm2435 = vcmp.gt.f32.partialorder %v2155, 0.0
    %vm2436 = vcmp.gt.f32.partialorder %v2333, 0.0
    %vm2437 = vcmp.gt.f32.partialorder %v1801, 0.0
    %vm2438 = vcmp.gt.f32.partialorder %v1979, 0.0
    %vm2439 = vcmp.gt.f32.partialorder %v2157, 0.0
    %vm2440 = vcmp.gt.f32.partialorder %v2335, 0.0
    %vm2441 = vcmp.gt.f32.partialorder %v1804, 0.0
    %vm2442 = vcmp.gt.f32.partialorder %v1982, 0.0
    %vm2443 = vcmp.gt.f32.partialorder %v2160, 0.0
    %vm2444 = vcmp.gt.f32.partialorder %v2338, 0.0
    %vm2445 = vcmp.gt.f32.partialorder %v1806, 0.0
    %vm2446 = vcmp.gt.f32.partialorder %v1984, 0.0
    %vm2447 = vcmp.gt.f32.partialorder %v2162, 0.0
    %vm2448 = vcmp.gt.f32.partialorder %v2340, 0.0
    %vm2449 = vcmp.gt.f32.partialorder %v1809, 0.0
    %vm2450 = vcmp.gt.f32.partialorder %v1987, 0.0
    %vm2451 = vcmp.gt.f32.partialorder %v2165, 0.0
    %vm2452 = vcmp.gt.f32.partialorder %v2343, 0.0
    %vm2453 = vcmp.gt.f32.partialorder %v1811, 0.0
    %vm2454 = vcmp.gt.f32.partialorder %v1989, 0.0
    %vm2455 = vcmp.gt.f32.partialorder %v2167, 0.0
    %vm2456 = vcmp.gt.f32.partialorder %v2345, 0.0
    %vm2457 = vcmp.gt.f32.partialorder %v1814, 0.0
    %vm2458 = vcmp.gt.f32.partialorder %v1992, 0.0
    %vm2459 = vcmp.gt.f32.partialorder %v2170, 0.0
    %vm2460 = vcmp.gt.f32.partialorder %v2348, 0.0
    %vm2461 = vcmp.gt.f32.partialorder %v1816, 0.0
    %vm2462 = vcmp.gt.f32.partialorder %v1994, 0.0
    %vm2463 = vcmp.gt.f32.partialorder %v2172, 0.0
    %vm2464 = vcmp.gt.f32.partialorder %v2350, 0.0
    %vm2465 = vcmp.gt.f32.partialorder %v1819, 0.0
    %vm2466 = vcmp.gt.f32.partialorder %v1997, 0.0
    %vm2467 = vcmp.gt.f32.partialorder %v2175, 0.0
    %vm2468 = vcmp.gt.f32.partialorder %v2353, 0.0
    %vm2469 = vcmp.gt.f32.partialorder %v1821, 0.0
    %vm2470 = vcmp.gt.f32.partialorder %v1999, 0.0
    %vm2471 = vcmp.gt.f32.partialorder %v2177, 0.0
    %vm2472 = vcmp.gt.f32.partialorder %v2355, 0.0
    %vm2473 = vcmp.gt.f32.partialorder %v1824, 0.0
    %vm2474 = vcmp.gt.f32.partialorder %v2002, 0.0
    %vm2475 = vcmp.gt.f32.partialorder %v2180, 0.0
    %vm2476 = vcmp.gt.f32.partialorder %v2358, 0.0
    %vm2477 = vcmp.gt.f32.partialorder %v1826, 0.0
    %vm2478 = vcmp.gt.f32.partialorder %v2004, 0.0
    %vm2479 = vcmp.gt.f32.partialorder %v2182, 0.0
    %vm2480 = vcmp.gt.f32.partialorder %v2360, 0.0
    %vm2481 = vcmp.gt.f32.partialorder %v1829, 0.0
    %vm2482 = vcmp.gt.f32.partialorder %v2007, 0.0
    %vm2483 = vcmp.gt.f32.partialorder %v2185, 0.0
    %vm2484 = vcmp.gt.f32.partialorder %v2363, 0.0
    %vm2485 = vcmp.gt.f32.partialorder %v1831, 0.0
    %vm2486 = vcmp.gt.f32.partialorder %v2009, 0.0
    %vm2487 = vcmp.gt.f32.partialorder %v2187, 0.0
    %vm2488 = vcmp.gt.f32.partialorder %v2365, 0.0
    %vm2489 = vcmp.gt.f32.partialorder %v1834, 0.0
    %vm2490 = vcmp.gt.f32.partialorder %v2012, 0.0
    %vm2491 = vcmp.gt.f32.partialorder %v2190, 0.0
    %vm2492 = vcmp.gt.f32.partialorder %v2368, 0.0
    %vm2493 = vcmp.gt.f32.partialorder %v1836, 0.0
    %vm2494 = vcmp.gt.f32.partialorder %v2014, 0.0
    %vm2495 = vcmp.gt.f32.partialorder %v2192, 0.0
    %vm2496 = vcmp.gt.f32.partialorder %v2370, 0.0
    %vm2497 = vcmp.gt.f32.partialorder %v1839, 0.0
    %vm2498 = vcmp.gt.f32.partialorder %v2017, 0.0
    %vm2499 = vcmp.gt.f32.partialorder %v2195, 0.0
    %vm2500 = vcmp.gt.f32.partialorder %v2373, 0.0
    %vm2501 = vcmp.gt.f32.partialorder %v1841, 0.0
    %vm2502 = vcmp.gt.f32.partialorder %v2019, 0.0
    %vm2503 = vcmp.gt.f32.partialorder %v2197, 0.0
    %vm2504 = vcmp.gt.f32.partialorder %v2375, 0.0
    %v2505 = vmul.f32 %v1764, 0.2
    %v2506 = vmul.f32 %v1942, 0.2
    %v2507 = vmul.f32 %v2120, 0.2
    %v2508 = vmul.f32 %v2298, 0.2
    %v2509 = vmul.f32 %v1766, 0.2
    %v2510 = vmul.f32 %v1944, 0.2
    %v2511 = vmul.f32 %v2122, 0.2
    %v2512 = vmul.f32 %v2300, 0.2
    %v2513 = vmul.f32 %v1769, 0.2
    %v2514 = vmul.f32 %v1947, 0.2
    %v2515 = vmul.f32 %v2125, 0.2
    %v2516 = vmul.f32 %v2303, 0.2
    %v2517 = vmul.f32 %v1771, 0.2
    %v2518 = vmul.f32 %v1949, 0.2
    %v2519 = vmul.f32 %v2127, 0.2
    %v2520 = vmul.f32 %v2305, 0.2
    %v2521 = vmul.f32 %v1774, 0.2
    %v2522 = vmul.f32 %v1952, 0.2
    %v2523 = vmul.f32 %v2130, 0.2
    %v2524 = vmul.f32 %v2308, 0.2
    %v2525 = vmul.f32 %v1776, 0.2
    %v2526 = vmul.f32 %v1954, 0.2
    %v2527 = vmul.f32 %v2132, 0.2
    %v2528 = vmul.f32 %v2310, 0.2
    %v2529 = vmul.f32 %v1779, 0.2
    %v2530 = vmul.f32 %v1957, 0.2
    %v2531 = vmul.f32 %v2135, 0.2
    %v2532 = vmul.f32 %v2313, 0.2
    %v2533 = vmul.f32 %v1781, 0.2
    %v2534 = vmul.f32 %v1959, 0.2
    %v2535 = vmul.f32 %v2137, 0.2
    %v2536 = vmul.f32 %v2315, 0.2
    %v2537 = vmul.f32 %v1784, 0.2
    %v2538 = vmul.f32 %v1962, 0.2
    %v2539 = vmul.f32 %v2140, 0.2
    %v2540 = vmul.f32 %v2318, 0.2
    %v2541 = vmul.f32 %v1786, 0.2
    %v2542 = vmul.f32 %v1964, 0.2
    %v2543 = vmul.f32 %v2142, 0.2
    %v2544 = vmul.f32 %v2320, 0.2
    %v2545 = vmul.f32 %v1789, 0.2
    %v2546 = vmul.f32 %v1967, 0.2
    %v2547 = vmul.f32 %v2145, 0.2
    %v2548 = vmul.f32 %v2323, 0.2
    %v2549 = vmul.f32 %v1791, 0.2
    %v2550 = vmul.f32 %v1969, 0.2
    %v2551 = vmul.f32 %v2147, 0.2
    %v2552 = vmul.f32 %v2325, 0.2
    %v2553 = vmul.f32 %v1794, 0.2
    %v2554 = vmul.f32 %v1972, 0.2
    %v2555 = vmul.f32 %v2150, 0.2
    %v2556 = vmul.f32 %v2328, 0.2
    %v2557 = vmul.f32 %v1796, 0.2
    %v2558 = vmul.f32 %v1974, 0.2
    %v2559 = vmul.f32 %v2152, 0.2
    %v2560 = vmul.f32 %v2330, 0.2
    %v2561 = vmul.f32 %v1799, 0.2
    %v2562 = vmul.f32 %v1977, 0.2
    %v2563 = vmul.f32 %v2155, 0.2
    %v2564 = vmul.f32 %v2333, 0.2
    %v2565 = vmul.f32 %v1801, 0.2
    %v2566 = vmul.f32 %v1979, 0.2
    %v2567 = vmul.f32 %v2157, 0.2
    %v2568 = vmul.f32 %v2335, 0.2
    %v2569 = vmul.f32 %v1804, 0.2
    %v2570 = vmul.f32 %v1982, 0.2
    %v2571 = vmul.f32 %v2160, 0.2
    %v2572 = vmul.f32 %v2338, 0.2
    %v2573 = vmul.f32 %v1806, 0.2
    %v2574 = vmul.f32 %v1984, 0.2
    %v2575 = vmul.f32 %v2162, 0.2
    %v2576 = vmul.f32 %v2340, 0.2
    %v2577 = vmul.f32 %v1809, 0.2
    %v2578 = vmul.f32 %v1987, 0.2
    %v2579 = vmul.f32 %v2165, 0.2
    %v2580 = vmul.f32 %v2343, 0.2
    %v2581 = vmul.f32 %v1811, 0.2
    %v2582 = vmul.f32 %v1989, 0.2
    %v2583 = vmul.f32 %v2167, 0.2
    %v2584 = vmul.f32 %v2345, 0.2
    %v2585 = vmul.f32 %v1814, 0.2
    %v2586 = vmul.f32 %v1992, 0.2
    %v2587 = vmul.f32 %v2170, 0.2
    %v2588 = vmul.f32 %v2348, 0.2
    %v2589 = vmul.f32 %v1816, 0.2
    %v2590 = vmul.f32 %v1994, 0.2
    %v2591 = vmul.f32 %v2172, 0.2
    %v2592 = vmul.f32 %v2350, 0.2
    %v2593 = vmul.f32 %v1819, 0.2
    %v2594 = vmul.f32 %v1997, 0.2
    %v2595 = vmul.f32 %v2175, 0.2
    %v2596 = vmul.f32 %v2353, 0.2
    %v2597 = vmul.f32 %v1821, 0.2
    %v2598 = vmul.f32 %v1999, 0.2
    %v2599 = vmul.f32 %v2177, 0.2
    %v2600 = vmul.f32 %v2355, 0.2
    %v2601 = vmul.f32 %v1824, 0.2
    %v2602 = vmul.f32 %v2002, 0.2
    %v2603 = vmul.f32 %v2180, 0.2
    %v2604 = vmul.f32 %v2358, 0.2
    %v2605 = vmul.f32 %v1826, 0.2
    %v2606 = vmul.f32 %v2004, 0.2
    %v2607 = vmul.f32 %v2182, 0.2
    %v2608 = vmul.f32 %v2360, 0.2
    %v2609 = vmul.f32 %v1829, 0.2
    %v2610 = vmul.f32 %v2007, 0.2
    %v2611 = vmul.f32 %v2185, 0.2
    %v2612 = vmul.f32 %v2363, 0.2
    %v2613 = vmul.f32 %v1831, 0.2
    %v2614 = vmul.f32 %v2009, 0.2
    %v2615 = vmul.f32 %v2187, 0.2
    %v2616 = vmul.f32 %v2365, 0.2
    %v2617 = vmul.f32 %v1834, 0.2
    %v2618 = vmul.f32 %v2012, 0.2
    %v2619 = vmul.f32 %v2190, 0.2
    %v2620 = vmul.f32 %v2368, 0.2
    %v2621 = vmul.f32 %v1836, 0.2
    %v2622 = vmul.f32 %v2014, 0.2
    %v2623 = vmul.f32 %v2192, 0.2
    %v2624 = vmul.f32 %v2370, 0.2
    %v2625 = vmul.f32 %v1839, 0.2
    %v2626 = vmul.f32 %v2017, 0.2
    %v2627 = vmul.f32 %v2195, 0.2
    %v2628 = vmul.f32 %v2373, 0.2
    %v2629 = vmul.f32 %v1841, 0.2
    %v2630 = vmul.f32 %v2019, 0.2
    %v2631 = vmul.f32 %v2197, 0.2
    %v2632 = vmul.f32 %v2375, 0.2
    %v2633 = vsel %vm2377, %v1764, %v2505
    %v2634 = vsel %vm2378, %v1942, %v2506
    %v2635 = vsel %vm2379, %v2120, %v2507
    %v2636 = vsel %vm2380, %v2298, %v2508
    %v2637 = vsel %vm2381, %v1766, %v2509
    %v2638 = vsel %vm2382, %v1944, %v2510
    %v2639 = vsel %vm2383, %v2122, %v2511
    %v2640 = vsel %vm2384, %v2300, %v2512
    %v2641 = vsel %vm2385, %v1769, %v2513
    %v2642 = vsel %vm2386, %v1947, %v2514
    %v2643 = vsel %vm2387, %v2125, %v2515
    %v2644 = vsel %vm2388, %v2303, %v2516
    %v2645 = vsel %vm2389, %v1771, %v2517
    %v2646 = vsel %vm2390, %v1949, %v2518
    %v2647 = vsel %vm2391, %v2127, %v2519
    %v2648 = vsel %vm2392, %v2305, %v2520
    %v2649 = vsel %vm2393, %v1774, %v2521
    %v2650 = vsel %vm2394, %v1952, %v2522
    %v2651 = vsel %vm2395, %v2130, %v2523
    %v2652 = vsel %vm2396, %v2308, %v2524
    %v2653 = vsel %vm2397, %v1776, %v2525
    %v2654 = vsel %vm2398, %v1954, %v2526
    %v2655 = vsel %vm2399, %v2132, %v2527
    %v2656 = vsel %vm2400, %v2310, %v2528
    %v2657 = vsel %vm2401, %v1779, %v2529
    %v2658 = vsel %vm2402, %v1957, %v2530
    %v2659 = vsel %vm2403, %v2135, %v2531
    %v2660 = vsel %vm2404, %v2313, %v2532
    %v2661 = vsel %vm2405, %v1781, %v2533
    %v2662 = vsel %vm2406, %v1959, %v2534
    %v2663 = vsel %vm2407, %v2137, %v2535
    %v2664 = vsel %vm2408, %v2315, %v2536
    %v2665 = vsel %vm2409, %v1784, %v2537
    %v2666 = vsel %vm2410, %v1962, %v2538
    %v2667 = vsel %vm2411, %v2140, %v2539
    %v2668 = vsel %vm2412, %v2318, %v2540
    %v2669 = vsel %vm2413, %v1786, %v2541
    %v2670 = vsel %vm2414, %v1964, %v2542
    %v2671 = vsel %vm2415, %v2142, %v2543
    %v2672 = vsel %vm2416, %v2320, %v2544
    %v2673 = vsel %vm2417, %v1789, %v2545
    %v2674 = vsel %vm2418, %v1967, %v2546
    %v2675 = vsel %vm2419, %v2145, %v2547
    %v2676 = vsel %vm2420, %v2323, %v2548
    %v2677 = vsel %vm2421, %v1791, %v2549
    %v2678 = vsel %vm2422, %v1969, %v2550
    %v2679 = vsel %vm2423, %v2147, %v2551
    %v2680 = vsel %vm2424, %v2325, %v2552
    %v2681 = vsel %vm2425, %v1794, %v2553
    %v2682 = vsel %vm2426, %v1972, %v2554
    %v2683 = vsel %vm2427, %v2150, %v2555
    %v2684 = vsel %vm2428, %v2328, %v2556
    %v2685 = vsel %vm2429, %v1796, %v2557
    %v2686 = vsel %vm2430, %v1974, %v2558
    %v2687 = vsel %vm2431, %v2152, %v2559
    %v2688 = vsel %vm2432, %v2330, %v2560
    %v2689 = vsel %vm2433, %v1799, %v2561
    %v2690 = vsel %vm2434, %v1977, %v2562
    %v2691 = vsel %vm2435, %v2155, %v2563
    %v2692 = vsel %vm2436, %v2333, %v2564
    %v2693 = vsel %vm2437, %v1801, %v2565
    %v2694 = vsel %vm2438, %v1979, %v2566
    %v2695 = vsel %vm2439, %v2157, %v2567
    %v2696 = vsel %vm2440, %v2335, %v2568
    %v2697 = vsel %vm2441, %v1804, %v2569
    %v2698 = vsel %vm2442, %v1982, %v2570
    %v2699 = vsel %vm2443, %v2160, %v2571
    %v2700 = vsel %vm2444, %v2338, %v2572
    %v2701 = vsel %vm2445, %v1806, %v2573
    %v2702 = vsel %vm2446, %v1984, %v2574
    %v2703 = vsel %vm2447, %v2162, %v2575
    %v2704 = vsel %vm2448, %v2340, %v2576
    %v2705 = vsel %vm2449, %v1809, %v2577
    %v2706 = vsel %vm2450, %v1987, %v2578
    %v2707 = vsel %vm2451, %v2165, %v2579
    %v2708 = vsel %vm2452, %v2343, %v2580
    %v2709 = vsel %vm2453, %v1811, %v2581
    %v2710 = vsel %vm2454, %v1989, %v2582
    %v2711 = vsel %vm2455, %v2167, %v2583
    %v2712 = vsel %vm2456, %v2345, %v2584
    %v2713 = vsel %vm2457, %v1814, %v2585
    %v2714 = vsel %vm2458, %v1992, %v2586
    %v2715 = vsel %vm2459, %v2170, %v2587
    %v2716 = vsel %vm2460, %v2348, %v2588
    %v2717 = vsel %vm2461, %v1816, %v2589
    %v2718 = vsel %vm2462, %v1994, %v2590
    %v2719 = vsel %vm2463, %v2172, %v2591
    %v2720 = vsel %vm2464, %v2350, %v2592
    %v2721 = vsel %vm2465, %v1819, %v2593
    %v2722 = vsel %vm2466, %v1997, %v2594
    %v2723 = vsel %vm2467, %v2175, %v2595
    %v2724 = vsel %vm2468, %v2353, %v2596
    %v2725 = vsel %vm2469, %v1821, %v2597
    %v2726 = vsel %vm2470, %v1999, %v2598
    %v2727 = vsel %vm2471, %v2177, %v2599
    %v2728 = vsel %vm2472, %v2355, %v2600
    %v2729 = vsel %vm2473, %v1824, %v2601
    %v2730 = vsel %vm2474, %v2002, %v2602
    %v2731 = vsel %vm2475, %v2180, %v2603
    %v2732 = vsel %vm2476, %v2358, %v2604
    %v2733 = vsel %vm2477, %v1826, %v2605
    %v2734 = vsel %vm2478, %v2004, %v2606
    %v2735 = vsel %vm2479, %v2182, %v2607
    %v2736 = vsel %vm2480, %v2360, %v2608
    %v2737 = vsel %vm2481, %v1829, %v2609
    %v2738 = vsel %vm2482, %v2007, %v2610
    %v2739 = vsel %vm2483, %v2185, %v2611
    %v2740 = vsel %vm2484, %v2363, %v2612
    %v2741 = vsel %vm2485, %v1831, %v2613
    %v2742 = vsel %vm2486, %v2009, %v2614
    %v2743 = vsel %vm2487, %v2187, %v2615
    %v2744 = vsel %vm2488, %v2365, %v2616
    %v2745 = vsel %vm2489, %v1834, %v2617
    %v2746 = vsel %vm2490, %v2012, %v2618
    %v2747 = vsel %vm2491, %v2190, %v2619
    %v2748 = vsel %vm2492, %v2368, %v2620
    %v2749 = vsel %vm2493, %v1836, %v2621
    %v2750 = vsel %vm2494, %v2014, %v2622
    %v2751 = vsel %vm2495, %v2192, %v2623
    %v2752 = vsel %vm2496, %v2370, %v2624
    %v2753 = vsel %vm2497, %v1839, %v2625
    %v2754 = vsel %vm2498, %v2017, %v2626
    %v2755 = vsel %vm2499, %v2195, %v2627
    %v2756 = vsel %vm2500, %v2373, %v2628
    %v2757 = vsel %vm2501, %v1841, %v2629
    %v2758 = vsel %vm2502, %v2019, %v2630
    %v2759 = vsel %vm2503, %v2197, %v2631
    %v2760 = vsel %vm2504, %v2375, %v2632
    %v2761 = vld [vmem:[%s5] sm:$0x3]
    %v2762 = vpack.c.bf16 %v2637, %v2633
    %v2763 = vpack.c.bf16 %v2638, %v2634
    %v2764 = vpack.c.bf16 %v2639, %v2635
    %v2765 = vpack.c.bf16 %v2640, %v2636
    %v2766 = vpack.c.bf16 %v2645, %v2641
    %v2767 = vpack.c.bf16 %v2646, %v2642
    %v2768 = vpack.c.bf16 %v2647, %v2643
    %v2769 = vpack.c.bf16 %v2648, %v2644
    %v2770 = vpack.c.bf16 %v2653, %v2649
    %v2771 = vpack.c.bf16 %v2654, %v2650
    %v2772 = vpack.c.bf16 %v2655, %v2651
    %v2773 = vpack.c.bf16 %v2656, %v2652
    %v2774 = vpack.c.bf16 %v2661, %v2657
    %v2775 = vpack.c.bf16 %v2662, %v2658
    %v2776 = vpack.c.bf16 %v2663, %v2659
    %v2777 = vpack.c.bf16 %v2664, %v2660
    %v2778 = vpack.c.bf16 %v2669, %v2665
    %v2779 = vpack.c.bf16 %v2670, %v2666
    %v2780 = vpack.c.bf16 %v2671, %v2667
    %v2781 = vpack.c.bf16 %v2672, %v2668
    %v2782 = vpack.c.bf16 %v2677, %v2673
    %v2783 = vpack.c.bf16 %v2678, %v2674
    %v2784 = vpack.c.bf16 %v2679, %v2675
    %v2785 = vpack.c.bf16 %v2680, %v2676
    %v2786 = vpack.c.bf16 %v2685, %v2681
    %v2787 = vpack.c.bf16 %v2686, %v2682
    %v2788 = vpack.c.bf16 %v2687, %v2683
    %v2789 = vpack.c.bf16 %v2688, %v2684
    %v2790 = vpack.c.bf16 %v2693, %v2689
    %v2791 = vpack.c.bf16 %v2694, %v2690
    %v2792 = vpack.c.bf16 %v2695, %v2691
    %v2793 = vpack.c.bf16 %v2696, %v2692
    %v2794 = vpack.c.bf16 %v2701, %v2697
    %v2795 = vpack.c.bf16 %v2702, %v2698
    %v2796 = vpack.c.bf16 %v2703, %v2699
    %v2797 = vpack.c.bf16 %v2704, %v2700
    %v2798 = vpack.c.bf16 %v2709, %v2705
    %v2799 = vpack.c.bf16 %v2710, %v2706
    %v2800 = vpack.c.bf16 %v2711, %v2707
    %v2801 = vpack.c.bf16 %v2712, %v2708
    %v2802 = vpack.c.bf16 %v2717, %v2713
    %v2803 = vpack.c.bf16 %v2718, %v2714
    %v2804 = vpack.c.bf16 %v2719, %v2715
    %v2805 = vpack.c.bf16 %v2720, %v2716
    %v2806 = vpack.c.bf16 %v2725, %v2721
    %v2807 = vpack.c.bf16 %v2726, %v2722
    %v2808 = vpack.c.bf16 %v2727, %v2723
    %v2809 = vpack.c.bf16 %v2728, %v2724
    %v2810 = vpack.c.bf16 %v2733, %v2729
    %v2811 = vpack.c.bf16 %v2734, %v2730
    %v2812 = vpack.c.bf16 %v2735, %v2731
    %v2813 = vpack.c.bf16 %v2736, %v2732
    %v2814 = vpack.c.bf16 %v2741, %v2737
    %v2815 = vpack.c.bf16 %v2742, %v2738
    %v2816 = vpack.c.bf16 %v2743, %v2739
    %v2817 = vpack.c.bf16 %v2744, %v2740
    %v2818 = vpack.c.bf16 %v2749, %v2745
    %v2819 = vpack.c.bf16 %v2750, %v2746
    %v2820 = vpack.c.bf16 %v2751, %v2747
    %v2821 = vpack.c.bf16 %v2752, %v2748
    %v2822 = vpack.c.bf16 %v2757, %v2753
    %v2823 = vpack.c.bf16 %v2758, %v2754
    %v2824 = vpack.c.bf16 %v2759, %v2755
    %v2825 = vpack.c.bf16 %v2760, %v2756
    %v2826 = vld [vmem:[#allocation2] sm:$0x1]
    %2828 = vset.pattern.permute.xlu0 0
    %2829 = vperm.xlu0 %2828, %v2826
    %v2830 = vpop.permute.xlu0 %2829
    %v2832 = vperm.slane %v2830, 0
    %2834 = vst [vmem:[#allocation1] ss:$9 sm:$0xff] %v2761
    %v2835 = vld [vmem:[#allocation1] sm:$0xff]
    %v2836 = vld [vmem:[#allocation1 + $0x9] sm:$0xff]
    %2839 = vmatpush.bf16.msra.mxu0 %v2790
    %2840 = vmatpush.bf16.msra.mxu0 %v2786
    %2841 = vmatpush.bf16.msra.mxu0 %v2782
    %2842 = vmatpush.bf16.msra.mxu0 %v2778
    %2843 = vmatpush.bf16.msra.mxu0 %v2774
    %2844 = vmatpush.bf16.msra.mxu0 %v2770
    %2845 = vmatpush.bf16.msra.mxu0 %v2766
    %2846 = vmatpush.bf16.msra.mxu0 %v2762
    %2847 = vmatmul.bf16.gmra.mxu0 %v2835
    %v2848 = vpop.f32.mrf.mxu0
    %v2849 = vadd.f32 %v2832, %v2848
    %v2850 = vpop.f32.mrf.mxu0
    %2851 = vdwg.mxu0
    %2852 = vmatpush.bf16.msra.mxu0 %v2822
    %2853 = vmatpush.bf16.msra.mxu0 %v2818
    %2854 = vmatpush.bf16.msra.mxu0 %v2814
    %2855 = vmatpush.bf16.msra.mxu0 %v2810
    %2856 = vmatpush.bf16.msra.mxu0 %v2806
    %2857 = vmatpush.bf16.msra.mxu0 %v2802
    %2858 = vmatpush.bf16.msra.mxu0 %v2798
    %2859 = vmatpush.bf16.msra.mxu0 %v2794
    %2860 = vmatmul.bf16.gmra.mxu0 %v2836
    %v2861 = vpop.f32.mrf.mxu0
    %v2862 = vadd.f32 %v2849, %v2861
    %v2863 = vpop.f32.mrf.mxu0
    %2864 = vdwg.mxu0
    %2865 = vmatpush.bf16.msra.mxu0 %v2791
    %2866 = vmatpush.bf16.msra.mxu0 %v2787
    %2867 = vmatpush.bf16.msra.mxu0 %v2783
    %2868 = vmatpush.bf16.msra.mxu0 %v2779
    %2869 = vmatpush.bf16.msra.mxu0 %v2775
    %2870 = vmatpush.bf16.msra.mxu0 %v2771
    %2871 = vmatpush.bf16.msra.mxu0 %v2767
    %2872 = vmatpush.bf16.msra.mxu0 %v2763
    %2873 = vmatmul.bf16.gmra.mxu0 %v2835
    %v2874 = vpop.f32.mrf.mxu0
    %v2875 = vadd.f32 %v2832, %v2874
    %v2876 = vpop.f32.mrf.mxu0
    %2877 = vdwg.mxu0
    %2878 = vmatpush.bf16.msra.mxu0 %v2823
    %2879 = vmatpush.bf16.msra.mxu0 %v2819
    %2880 = vmatpush.bf16.msra.mxu0 %v2815
    %2881 = vmatpush.bf16.msra.mxu0 %v2811
    %2882 = vmatpush.bf16.msra.mxu0 %v2807
    %2883 = vmatpush.bf16.msra.mxu0 %v2803
    %2884 = vmatpush.bf16.msra.mxu0 %v2799
    %2885 = vmatpush.bf16.msra.mxu0 %v2795
    %2886 = vmatmul.bf16.gmra.mxu0 %v2836
    %v2887 = vpop.f32.mrf.mxu0
    %v2888 = vadd.f32 %v2875, %v2887
    %v2889 = vpop.f32.mrf.mxu0
    %2890 = vdwg.mxu0
    %2891 = vmatpush.bf16.msra.mxu0 %v2792
    %2892 = vmatpush.bf16.msra.mxu0 %v2788
    %2893 = vmatpush.bf16.msra.mxu0 %v2784
    %2894 = vmatpush.bf16.msra.mxu0 %v2780
    %2895 = vmatpush.bf16.msra.mxu0 %v2776
    %2896 = vmatpush.bf16.msra.mxu0 %v2772
    %2897 = vmatpush.bf16.msra.mxu0 %v2768
    %2898 = vmatpush.bf16.msra.mxu0 %v2764
    %2899 = vmatmul.bf16.gmra.mxu0 %v2835
    %v2900 = vpop.f32.mrf.mxu0
    %v2901 = vadd.f32 %v2832, %v2900
    %v2902 = vpop.f32.mrf.mxu0
    %2903 = vdwg.mxu0
    %2904 = vmatpush.bf16.msra.mxu0 %v2824
    %2905 = vmatpush.bf16.msra.mxu0 %v2820
    %2906 = vmatpush.bf16.msra.mxu0 %v2816
    %2907 = vmatpush.bf16.msra.mxu0 %v2812
    %2908 = vmatpush.bf16.msra.mxu0 %v2808
    %2909 = vmatpush.bf16.msra.mxu0 %v2804
    %2910 = vmatpush.bf16.msra.mxu0 %v2800
    %2911 = vmatpush.bf16.msra.mxu0 %v2796
    %2912 = vmatmul.bf16.gmra.mxu0 %v2836
    %v2913 = vpop.f32.mrf.mxu0
    %v2914 = vadd.f32 %v2901, %v2913
    %v2915 = vpop.f32.mrf.mxu0
    %2916 = vdwg.mxu0
    %2917 = vmatpush.bf16.msra.mxu0 %v2793
    %2918 = vmatpush.bf16.msra.mxu0 %v2789
    %2919 = vmatpush.bf16.msra.mxu0 %v2785
    %2920 = vmatpush.bf16.msra.mxu0 %v2781
    %2921 = vmatpush.bf16.msra.mxu0 %v2777
    %2922 = vmatpush.bf16.msra.mxu0 %v2773
    %2923 = vmatpush.bf16.msra.mxu0 %v2769
    %2924 = vmatpush.bf16.msra.mxu0 %v2765
    %2925 = vmatmul.bf16.gmra.mxu0 %v2835
    %v2926 = vpop.f32.mrf.mxu0
    %v2927 = vadd.f32 %v2832, %v2926
    %v2928 = vpop.f32.mrf.mxu0
    %2929 = vdwg.mxu0
    %2930 = vmatpush.bf16.msra.mxu0 %v2825
    %2931 = vmatpush.bf16.msra.mxu0 %v2821
    %2932 = vmatpush.bf16.msra.mxu0 %v2817
    %2933 = vmatpush.bf16.msra.mxu0 %v2813
    %2934 = vmatpush.bf16.msra.mxu0 %v2809
    %2935 = vmatpush.bf16.msra.mxu0 %v2805
    %2936 = vmatpush.bf16.msra.mxu0 %v2801
    %2937 = vmatpush.bf16.msra.mxu0 %v2797
    %2938 = vmatmul.bf16.gmra.mxu0 %v2836
    %v2939 = vpop.f32.mrf.mxu0
    %v2940 = vadd.f32 %v2927, %v2939
    %v2941 = vpop.f32.mrf.mxu0
    %2942 = vdwg.mxu0
    %v2943 = vsub.f32 0.0, %v2862
    %v2944 = vsub.f32 0.0, %v2888
    %v2945 = vsub.f32 0.0, %v2914
    %v2946 = vsub.f32 0.0, %v2940
    %v2947 = vmul.f32 %v2943, 1.442695
    %v2948 = vpow.pop %v2947
    %v2949 = vmul.f32 %v2944, 1.442695
    %v2950 = vpow.pop %v2949
    %v2951 = vmul.f32 %v2945, 1.442695
    %v2952 = vpow.pop %v2951
    %v2953 = vmul.f32 %v2946, 1.442695
    %v2954 = vpow.pop %v2953
    %v2955 = vadd.f32 %v2948, 1.0
    %v2956 = vadd.f32 %v2950, 1.0
    %v2957 = vadd.f32 %v2952, 1.0
    %v2958 = vadd.f32 %v2954, 1.0
    %v2959 = vrcp.pop %v2955
    %v2960 = vmul.f32 %v2955, %v2959
    %v2961 = vsub.f32 1.0, %v2960
    %v2962 = vmul.f32 %v2959, %v2961
    %v2963 = vadd.f32 %v2959, %v2962
    %vm2964 = vweird.f32 %v2955
    %vm2965 = vweird.f32 %v2959
    %vm2966 = vmor %vm2964, %vm2965
    %v2967 = vsel %vm2966, %v2959, %v2963
    %v2968 = vand.u32 2147483647, %v2955
    %vm2969 = vcmp.eq.f32.partialorder %v2968, 8.507059e+37
    %v2970 = vand.u32 %v2955, 2147483648
    %v2971 = vor.u32 1.1754944e-38, %v2970
    %v2972 = vsel %vm2969, %v2971, %v2967
    %v2973 = vmul.f32 1.0, %v2972
    %v2974 = vrcp.pop %v2956
    %v2975 = vmul.f32 %v2956, %v2974
    %v2976 = vsub.f32 1.0, %v2975
    %v2977 = vmul.f32 %v2974, %v2976
    %v2978 = vadd.f32 %v2974, %v2977
    %vm2979 = vweird.f32 %v2956
    %vm2980 = vweird.f32 %v2974
    %vm2981 = vmor %vm2979, %vm2980
    %v2982 = vsel %vm2981, %v2974, %v2978
    %v2983 = vand.u32 2147483647, %v2956
    %vm2984 = vcmp.eq.f32.partialorder %v2983, 8.507059e+37
    %v2985 = vand.u32 %v2956, 2147483648
    %v2986 = vor.u32 1.1754944e-38, %v2985
    %v2987 = vsel %vm2984, %v2986, %v2982
    %v2988 = vmul.f32 1.0, %v2987
    %v2989 = vrcp.pop %v2957
    %v2990 = vmul.f32 %v2957, %v2989
    %v2991 = vsub.f32 1.0, %v2990
    %v2992 = vmul.f32 %v2989, %v2991
    %v2993 = vadd.f32 %v2989, %v2992
    %vm2994 = vweird.f32 %v2957
    %vm2995 = vweird.f32 %v2989
    %vm2996 = vmor %vm2994, %vm2995
    %v2997 = vsel %vm2996, %v2989, %v2993
    %v2998 = vand.u32 2147483647, %v2957
    %vm2999 = vcmp.eq.f32.partialorder %v2998, 8.507059e+37
    %v3000 = vand.u32 %v2957, 2147483648
    %v3001 = vor.u32 1.1754944e-38, %v3000
    %v3002 = vsel %vm2999, %v3001, %v2997
    %v3003 = vmul.f32 1.0, %v3002
    %v3004 = vrcp.pop %v2958
    %v3005 = vmul.f32 %v2958, %v3004
    %v3006 = vsub.f32 1.0, %v3005
    %v3007 = vmul.f32 %v3004, %v3006
    %v3008 = vadd.f32 %v3004, %v3007
    %vm3009 = vweird.f32 %v2958
    %vm3010 = vweird.f32 %v3004
    %vm3011 = vmor %vm3009, %vm3010
    %v3012 = vsel %vm3011, %v3004, %v3008
    %v3013 = vand.u32 2147483647, %v2958
    %vm3014 = vcmp.eq.f32.partialorder %v3013, 8.507059e+37
    %v3015 = vand.u32 %v2958, 2147483648
    %v3016 = vor.u32 1.1754944e-38, %v3015
    %v3017 = vsel %vm3014, %v3016, %v3012
    %v3018 = vmul.f32 1.0, %v3017
    %v3023 = vrot.slane %v2988, 7
    %v3024 = vrot.slane %v3003, 6
    %v3025 = vrot.slane %v3018, 5
    %vm3026 = vcmask 1040384
    %v3027 = vsel %vm3026, %v2973, %v3023
    %vm3028 = vcmask 1042434
    %v3029 = vsel %vm3028, %v3024, %v3025
    %vm3030 = vcmask 1041408
    %v3031 = vsel %vm3030, %v3027, %v3029
    %v3033 = vlaneseq
    %vm3034 = vcmp.ge.s32.totalorder %v3033, 0
    %vm3035 = vcmp.lt.s32.totalorder %v3033, 512
    %vm3036 = vmand %vm3034, %vm3035
    %3037 = vst.msk [vmem:[#allocation8] sm:$0xf] %vm3036, %v3031
    // Predicated region
    $region38: #{tpu_custom_call.1} parent=1 // pred_check
      _
    $region39: #{tpu_custom_call.1} parent=1 // pred_check_branch
      %3039 = sbr.rel (0) target = $region41
    $region40: #{tpu_custom_call.1} parent=1 // pred_region
      %3041 = vsyncadd [#allocation5], 0
      %s3043 = sshll.u32 [#allocation8], 4
      %s3044 = int_to_ptr.vmem [resolvable:$true] %s3043
      %s3045 = sshll.u32 %s7, 4
      %s3046 = int_to_ptr.hbm [resolvable:$true] %s3045
      %3048 = dma.vmem_to_hbm [thread:$0]  %s3044, 64, %s3046, [#allocation5]
    $region41: #{tpu_custom_call.1} parent=1 // pred_fallthru
      _
    // Predicated region
    $region42: #{tpu_custom_call.1} parent=1 // pred_check
      _
    $region43: #{tpu_custom_call.1} parent=1 // pred_check_branch
      %3050 = sbr.rel (0) target = $region45
    $region44: #{tpu_custom_call.1} parent=1 // pred_region
      %3052 = dma.done [#allocation5], 64
    $region45: #{tpu_custom_call.1} parent=1 // pred_fallthru
      _
    %3053 = vsyncpa [#allocation4], 1
    %3054 = vsyncpa [#allocation7], 1
    %3055 = vsyncpa [#allocation5], 1

</llo_original>
